<compile_context>
chip_gen: v5e
topology: v5e:2x2
jax: 0.10.0
libtpu: 0.0.40
codegen_flags: <defaults>
</compile_context>

<pallas_src>
import math

import jax
import jax.numpy as jnp
import numpy as np
from jax import lax
from jax.experimental import pallas as pl
from jax.experimental.pallas import tpu as pltpu

# ---- config (small, consistent with the module) -----------------------------
EMB_DIM = 32          # cfg['emb_dim']
N_HEADS = 4           # cfg['n_heads']
HEAD_DIM = EMB_DIM // N_HEADS
SEQ_LEN = 8           # cfg['context_length']
BATCH = 2
HIDDEN = 4 * EMB_DIM  # FeedForward expansion
DROP_RATE = 0.0       # dropout rate 0.0 (eval semantics) -> identity
QKV_BIAS = False      # cfg['qkv_bias']
EPS = 1e-5            # book's custom LayerNorm eps
NEG_BIG = -1e30       # additive mask bias (finite; diagonal never masked)

# lane width of the packed small-bias slab (must hold 3*D and 4*D)
SMALL_LANES = max(3 * EMB_DIM, HIDDEN)
# in-kernel block-diagonal mask uses the xor trick -> needs power-of-two SEQ_LEN
assert SEQ_LEN & (SEQ_LEN - 1) == 0, "SEQ_LEN must be a power of two (use // T otherwise)"


# ---- in-kernel helpers -------------------------------------------------------
def _layernorm(x):
    # affine (scale/shift) is folded into the downstream weights at pack time,
    # so only the pure normalization stays in-kernel; rsqrt runs on the EUP.
    mean = jnp.mean(x, axis=-1, keepdims=True)
    var = jnp.mean((x - mean) ** 2, axis=-1, keepdims=True)
    return (x - mean) * lax.rsqrt(var + EPS)


def _gelu(x):
    # book GELU: tanh approximation
    return 0.5 * x * (1.0 + jnp.tanh(
        jnp.sqrt(2.0 / jnp.pi) * (x + 0.044715 * x ** 3)))


# ---- Pallas kernel: whole (B*T, D) problem in a single invocation ------------
def transformer_block_kernel(x_ref, wqkv_ref, wo_ref, w1_ref, w2_ref,
                             smalls_ref, out_ref):
    B, T, D, H, hd = BATCH, SEQ_LEN, EMB_DIM, N_HEADS, HEAD_DIM
    BT = B * T

    x = x_ref[...]                                   # (B*T, D) float32
    smalls = smalls_ref[...]                         # (4, SMALL_LANES) packed biases
    bqkv = smalls[0:1, 0:3 * D]                      # LN1-shift folded through Wqkv
    b1 = smalls[1:2, 0:HIDDEN]                       # FF bias1 (+ LN2-shift @ W1)
    bo = smalls[2:3, 0:D]                            # attention out-proj bias
    b2 = smalls[3:4, 0:D]                            # FF bias2

    # ---- block 1: norm1 -> causal multi-head attention -> (dropout) -> +res --
    shortcut = x
    xn = _layernorm(x)                               # affine folded into wqkv/bqkv

    # fused QKV projection: one (B*T, D) x (D, 3D) matmul
    # (1/sqrt(head_dim) and LN1 scale are pre-folded into wqkv; LN1 shift -> bqkv)
    qkv = jnp.dot(xn, wqkv_ref[...], preferred_element_type=jnp.float32) + bqkv
    q = qkv[:, 0:D].reshape(BT, H, hd)
    k = qkv[:, D:2 * D].reshape(BT, H, hd)
    v = qkv[:, 2 * D:3 * D].reshape(BT, H, hd)

    # batch folded into the "sequence" axis: one head-batched attention over all
    # B*T rows with a block-diagonal causal additive mask (no per-batch loop, no
    # concatenate).  Built in-kernel from iota -> one fewer input DMA.
    row = lax.broadcasted_iota(jnp.int32, (BT, BT), 0)
    col = lax.broadcasted_iota(jnp.int32, (BT, BT), 1)
    same_seq = (row ^ col) < T                       # same batch iff high bits equal (T pow2)
    allowed = (col <= row) & same_seq
    mask_bias = jnp.where(allowed, jnp.float32(0.0), jnp.float32(NEG_BIG))

    scores = jnp.einsum('nhd,mhd->hnm', q, k,
                        preferred_element_type=jnp.float32)     # (H, BT, BT)
    scores = scores + mask_bias[None, :, :]
    m = jnp.max(scores, axis=-1, keepdims=True)
    p = jnp.exp(scores - m)
    denom = jnp.sum(p, axis=-1, keepdims=True)
    attn = p / denom                                 # exact divide: EUP idle at this size
    # attention-weight dropout (rate 0.0) is the identity
    ctx = jnp.einsum('hnm,mhd->nhd', attn, v,
                     preferred_element_type=jnp.float32)        # (BT, H, hd)
    ctx = ctx.reshape(BT, D)

    att_out = jnp.dot(ctx, wo_ref[...],
                      preferred_element_type=jnp.float32) + bo
    # drop_shortcut (rate 0.0) is the identity
    x1 = att_out + shortcut

    # ---- block 2: norm2 -> feed-forward (GELU) -> (dropout) -> +residual -----
    xn2 = _layernorm(x1)                             # LN2 affine folded into w1/b1
    h = jnp.dot(xn2, w1_ref[...],
                preferred_element_type=jnp.float32) + b1
    h = _gelu(h)
    ff_out = jnp.dot(h, w2_ref[...],
                     preferred_element_type=jnp.float32) + b2

    # single slab store of the whole (B*T, D) output
    out_ref[...] = (ff_out + x1).astype(out_ref.dtype)


# ---- pack-time folding ---------------------------------------------------------
def pack_params(p):
    """Fuse QKV weights, fold 1/sqrt(hd) and both LayerNorm affines into the
    downstream weights, and pack all small bias vectors into one (4, 128) slab."""
    D, H4 = EMB_DIM, HIDDEN
    inv_sqrt_hd = jnp.float32(1.0 / math.sqrt(HEAD_DIM))

    # fused QKV weight with the attention score scale folded into the Wq columns
    wqkv = jnp.concatenate([p['wq'] * inv_sqrt_hd, p['wk'], p['wv']], axis=1)  # (D, 3D)
    # LN1 affine fold:  (s*xn + t) @ W = xn @ (diag(s) @ W) + t @ W
    bqkv = p['ln1_b'] @ wqkv                          # (1, 3D)  (t @ W, pre-row-scale)
    wqkv = wqkv * p['ln1_s'][0][:, None]              # diag(s) @ W

    # LN2 affine fold into the first FF layer
    b1 = p['b1'] + p['ln2_b'] @ p['w1']               # (1, 4D)
    w1 = p['w1'] * p['ln2_s'][0][:, None]             # (D, 4D)

    smalls = jnp.zeros((4, SMALL_LANES), jnp.float32)
    smalls = smalls.at[0, 0:3 * D].set(bqkv[0])
    smalls = smalls.at[1, 0:H4].set(b1[0])
    smalls = smalls.at[2, 0:D].set(p['bo'][0])
    smalls = smalls.at[3, 0:D].set(p['b2'][0])

    return {'wqkv': wqkv, 'wo': p['wo'], 'w1': w1, 'w2': p['w2'], 'smalls': smalls}


# ---- wrapper -------------------------------------------------------------------
def transformer_block(x, packed):
    B, T, D = x.shape
    x2 = x.reshape(B * T, D)                 # fold batch into rows
    vmem = pl.BlockSpec(memory_space=pltpu.MemorySpace.VMEM)

    out = pl.pallas_call(
        transformer_block_kernel,
        out_shape=jax.ShapeDtypeStruct((B * T, D), x.dtype),
        in_specs=[vmem] * 6,
        out_specs=vmem,
        # no grid: whole problem (< 1 MiB of VMEM) in one invocation.  On v7x this
        # runs on one TensorCore; add a "parallel" row-block grid axis (and bf16
        # matmul operands on v6e/v7x) only once B*T / D grow enough to amortize the
        # ~0.35 us per-step pipeline overhead.
    )(x2, packed['wqkv'], packed['wo'], packed['w1'], packed['w2'],
      packed['smalls'])
    return out.reshape(B, T, D)


# ---- deterministic parameter init ---------------------------------------------
def init_params(key):
    ks = jax.random.split(key, 6)
    g = lambda k, shape: (jax.random.normal(k, shape, jnp.float32) * 0.02)
    D, H4 = EMB_DIM, HIDDEN
    return {
        # attention (qkv_bias=False -> no q/k/v biases)
        'wq': g(ks[0], (D, D)),
        'wk': g(ks[1], (D, D)),
        'wv': g(ks[2], (D, D)),
        'wo': g(ks[3], (D, D)),
        'bo': jnp.zeros((1, D), jnp.float32),
        # feed-forward
        'w1': g(ks[4], (D, H4)),
        'b1': jnp.zeros((1, H4), jnp.float32),
        'w2': g(ks[5], (H4, D)),
        'b2': jnp.zeros((1, D), jnp.float32),
        # layernorms (scale=1, shift=0)
        'ln1_s': jnp.ones((1, D), jnp.float32),
        'ln1_b': jnp.zeros((1, D), jnp.float32),
        'ln2_s': jnp.ones((1, D), jnp.float32),
        'ln2_b': jnp.zeros((1, D), jnp.float32),
    }


# ---- pure-JAX reference (mirrors PyTorch forward exactly) ----------------------
def reference(x, p):
    def ln(x, s, b):
        m = jnp.mean(x, axis=-1, keepdims=True)
        v = jnp.mean((x - m) ** 2, axis=-1, keepdims=True)
        return s * ((x - m) / jnp.sqrt(v + EPS)) + b

    B, T, D = x.shape
    shortcut = x
    xn = ln(x, p['ln1_s'][0], p['ln1_b'][0])
    q = (xn @ p['wq']).reshape(B, T, N_HEADS, HEAD_DIM).transpose(0, 2, 1, 3)
    k = (xn @ p['wk']).reshape(B, T, N_HEADS, HEAD_DIM).transpose(0, 2, 1, 3)
    v = (xn @ p['wv']).reshape(B, T, N_HEADS, HEAD_DIM).transpose(0, 2, 1, 3)
    scores = jnp.einsum('bhtd,bhsd->bhts', q, k)
    mask = jnp.triu(jnp.ones((T, T), bool), k=1)
    scores = jnp.where(mask, -jnp.inf, scores)
    attn = jax.nn.softmax(scores / math.sqrt(HEAD_DIM), axis=-1)
    ctx = jnp.einsum('bhts,bhsd->bhtd', attn, v).transpose(0, 2, 1, 3)
    ctx = ctx.reshape(B, T, D)
    att_out = ctx @ p['wo'] + p['bo'][0]
    x1 = att_out + shortcut
    xn2 = ln(x1, p['ln2_s'][0], p['ln2_b'][0])
    h = xn2 @ p['w1'] + p['b1'][0]
    h = 0.5 * h * (1.0 + jnp.tanh(jnp.sqrt(2.0 / jnp.pi) * (h + 0.044715 * h ** 3)))
    ff_out = h @ p['w2'] + p['b2'][0]
    return ff_out + x1


if __name__ == "__main__":
    key = jax.random.PRNGKey(0)
    kx, kp = jax.random.split(key)
    x = jax.random.normal(kx, (BATCH, SEQ_LEN, EMB_DIM), jnp.float32)
    params = init_params(kp)
    packed = pack_params(params)   # one-time pack-time folding (outside the kernel)

    out = transformer_block(x, packed)
    out = jax.block_until_ready(out)

    ref = reference(x, params)
    np.testing.assert_allclose(np.asarray(out), np.asarray(ref),
                               rtol=1e-4, atol=1e-5)
    # TODO(synk): dropout with drop_rate>0 (training mode) would need pltpu.prng_*;
    # here drop_rate=0.0 (eval semantics), so both dropouts are identities.
    print("KERNEL_OK")
</pallas_src>

<mosaic_0001>
module attributes {stable_mosaic.version = 11 : i64} {
  func.func @transformer_block_kernel(%arg0: memref<16x32xf32, #tpu.memory_space<vmem>>, %arg1: memref<32x96xf32, #tpu.memory_space<vmem>>, %arg2: memref<32x32xf32, #tpu.memory_space<vmem>>, %arg3: memref<32x128xf32, #tpu.memory_space<vmem>>, %arg4: memref<128x32xf32, #tpu.memory_space<vmem>>, %arg5: memref<4x128xf32, #tpu.memory_space<vmem>>, %arg6: memref<16x32xf32, #tpu.memory_space<vmem>>) attributes {dimension_semantics = [], scalar_prefetch = 0 : i64, scratch_operands = 0 : i64, tpu.core_type = #tpu.core_type<tc>} {
    %c0 = arith.constant 0 : index
    %c0_0 = arith.constant 0 : index
    %0 = vector.load %arg0[%c0, %c0_0] : memref<16x32xf32, #tpu.memory_space<vmem>>, vector<16x32xf32>
    %c0_1 = arith.constant 0 : index
    %c0_2 = arith.constant 0 : index
    %1 = vector.load %arg5[%c0_1, %c0_2] : memref<4x128xf32, #tpu.memory_space<vmem>>, vector<4x128xf32>
    %2 = vector.extract_strided_slice %1 {offsets = [0, 0], sizes = [1, 96], strides = [1, 1]} : vector<4x128xf32> to vector<1x96xf32>
    %3 = vector.extract_strided_slice %1 {offsets = [1, 0], sizes = [1, 128], strides = [1, 1]} : vector<4x128xf32> to vector<1x128xf32>
    %4 = vector.extract_strided_slice %1 {offsets = [2, 0], sizes = [1, 32], strides = [1, 1]} : vector<4x128xf32> to vector<1x32xf32>
    %5 = vector.extract_strided_slice %1 {offsets = [3, 0], sizes = [1, 32], strides = [1, 1]} : vector<4x128xf32> to vector<1x32xf32>
    %cst = arith.constant dense<0.000000e+00> : vector<16xf32>
    %6 = vector.multi_reduction <add>, %0, %cst [1] : vector<16x32xf32> to vector<16xf32>
    %7 = vector.shape_cast %6 : vector<16xf32> to vector<16x1xf32>
    %cst_3 = arith.constant 3.200000e+01 : f32
    %8 = vector.broadcast %cst_3 : f32 to vector<16x1xf32>
    %9 = arith.divf %7, %8 : vector<16x1xf32>
    %10 = vector.broadcast %9 : vector<16x1xf32> to vector<16x32xf32>
    %11 = arith.subf %0, %10 : vector<16x32xf32>
    %12 = arith.mulf %11, %11 : vector<16x32xf32>
    %cst_4 = arith.constant dense<0.000000e+00> : vector<16xf32>
    %13 = vector.multi_reduction <add>, %12, %cst_4 [1] : vector<16x32xf32> to vector<16xf32>
    %14 = vector.shape_cast %13 : vector<16xf32> to vector<16x1xf32>
    %cst_5 = arith.constant 3.200000e+01 : f32
    %15 = vector.broadcast %cst_5 : f32 to vector<16x1xf32>
    %16 = arith.divf %14, %15 : vector<16x1xf32>
    %17 = vector.broadcast %9 : vector<16x1xf32> to vector<16x32xf32>
    %18 = arith.subf %0, %17 : vector<16x32xf32>
    %cst_6 = arith.constant 9.99999974E-6 : f32
    %19 = vector.broadcast %cst_6 : f32 to vector<16x1xf32>
    %20 = arith.addf %16, %19 : vector<16x1xf32>
    %21 = math.rsqrt %20 : vector<16x1xf32>
    %22 = vector.broadcast %21 : vector<16x1xf32> to vector<16x32xf32>
    %23 = arith.mulf %18, %22 : vector<16x32xf32>
    %c0_7 = arith.constant 0 : index
    %c0_8 = arith.constant 0 : index
    %24 = vector.load %arg1[%c0_7, %c0_8] : memref<32x96xf32, #tpu.memory_space<vmem>>, vector<32x96xf32>
    %cst_9 = arith.constant dense<0.000000e+00> : vector<16x96xf32>
    %25 = tpu.matmul %23, %24, %cst_9 {dimension_numbers = #tpu.dot_dimension_numbers<[1], [0], [0], [1], [0, 0, 1, 1], [], []>} : vector<16x32xf32>, vector<32x96xf32>, vector<16x96xf32> -> vector<16x96xf32>
    %26 = vector.broadcast %2 : vector<1x96xf32> to vector<16x96xf32>
    %27 = arith.addf %25, %26 : vector<16x96xf32>
    %28 = vector.extract_strided_slice %27 {offsets = [0, 0], sizes = [16, 32], strides = [1, 1]} : vector<16x96xf32> to vector<16x32xf32>
    %29 = vector.shape_cast %28 : vector<16x32xf32> to vector<16x4x8xf32>
    %30 = vector.extract_strided_slice %27 {offsets = [0, 32], sizes = [16, 32], strides = [1, 1]} : vector<16x96xf32> to vector<16x32xf32>
    %31 = vector.shape_cast %30 : vector<16x32xf32> to vector<16x4x8xf32>
    %32 = vector.extract_strided_slice %27 {offsets = [0, 64], sizes = [16, 32], strides = [1, 1]} : vector<16x96xf32> to vector<16x32xf32>
    %33 = vector.shape_cast %32 : vector<16x32xf32> to vector<16x4x8xf32>
    %34 = tpu.iota {dimensions = array<i32: 0>} : vector<16x16xi32>
    %35 = tpu.iota {dimensions = array<i32: 1>} : vector<16x16xi32>
    %36 = arith.xori %34, %35 : vector<16x16xi32>
    %c8_i32 = arith.constant 8 : i32
    %37 = vector.broadcast %c8_i32 : i32 to vector<16x16xi32>
    %38 = arith.cmpi slt, %36, %37 : vector<16x16xi32>
    %39 = arith.cmpi sle, %35, %34 : vector<16x16xi32>
    %40 = arith.andi %39, %38 : vector<16x16xi1>
    %cst_10 = arith.constant 0.000000e+00 : f32
    %cst_11 = arith.constant -1.000000e+30 : f32
    %41 = vector.broadcast %cst_10 : f32 to vector<16x16xf32>
    %42 = vector.broadcast %cst_11 : f32 to vector<16x16xf32>
    %43 = arith.select %40, %41, %42 : vector<16x16xi1>, vector<16x16xf32>
    "tpu.trace_start"() <{level = 10 : i32, message = "nhd,mhd->hnm"}> : () -> ()
    %cst_12 = arith.constant dense<0.000000e+00> : vector<4x16x16xf32>
    %44 = tpu.matmul %29, %31, %cst_12 {dimension_numbers = #tpu.dot_dimension_numbers<[2], [2], [0], [0], [0, 1, 0, 0, 1, 0], [1], [1]>} : vector<16x4x8xf32>, vector<16x4x8xf32>, vector<4x16x16xf32> -> vector<4x16x16xf32>
    "tpu.trace_stop"() : () -> ()
    %45 = vector.shape_cast %43 : vector<16x16xf32> to vector<1x16x16xf32>
    %46 = vector.broadcast %45 : vector<1x16x16xf32> to vector<4x16x16xf32>
    %47 = arith.addf %44, %46 : vector<4x16x16xf32>
    %cst_13 = arith.constant dense<0xFF800000> : vector<4x16xf32>
    %48 = vector.multi_reduction <maximumf>, %47, %cst_13 [2] : vector<4x16x16xf32> to vector<4x16xf32>
    %49 = vector.shape_cast %48 : vector<4x16xf32> to vector<4x16x1xf32>
    %50 = vector.broadcast %49 : vector<4x16x1xf32> to vector<4x16x16xf32>
    %51 = arith.subf %47, %50 : vector<4x16x16xf32>
    %52 = math.exp %51 : vector<4x16x16xf32>
    %cst_14 = arith.constant dense<0.000000e+00> : vector<4x16xf32>
    %53 = vector.multi_reduction <add>, %52, %cst_14 [2] : vector<4x16x16xf32> to vector<4x16xf32>
    %54 = vector.shape_cast %53 : vector<4x16xf32> to vector<4x16x1xf32>
    %55 = vector.broadcast %54 : vector<4x16x1xf32> to vector<4x16x16xf32>
    %56 = arith.divf %52, %55 : vector<4x16x16xf32>
    "tpu.trace_start"() <{level = 10 : i32, message = "hnm,mhd->nhd"}> : () -> ()
    %cst_15 = arith.constant dense<0.000000e+00> : vector<4x8x16xf32>
    %57 = tpu.matmul %33, %56, %cst_15 {dimension_numbers = #tpu.dot_dimension_numbers<[0], [2], [2], [1], [0, 1, 0, 2, 1, 1], [1], [0]>} : vector<16x4x8xf32>, vector<4x16x16xf32>, vector<4x8x16xf32> -> vector<4x8x16xf32>
    %58 = tpu.transpose %57, [2, 0, 1] : vector<4x8x16xf32> -> vector<16x4x8xf32>
    "tpu.trace_stop"() : () -> ()
    %59 = vector.shape_cast %58 : vector<16x4x8xf32> to vector<16x32xf32>
    %c0_16 = arith.constant 0 : index
    %c0_17 = arith.constant 0 : index
    %60 = vector.load %arg2[%c0_16, %c0_17] : memref<32x32xf32, #tpu.memory_space<vmem>>, vector<32x32xf32>
    %cst_18 = arith.constant dense<0.000000e+00> : vector<16x32xf32>
    %61 = tpu.matmul %59, %60, %cst_18 {dimension_numbers = #tpu.dot_dimension_numbers<[1], [0], [0], [1], [0, 0, 1, 1], [], []>} : vector<16x32xf32>, vector<32x32xf32>, vector<16x32xf32> -> vector<16x32xf32>
    %62 = vector.broadcast %4 : vector<1x32xf32> to vector<16x32xf32>
    %63 = arith.addf %61, %62 : vector<16x32xf32>
    %64 = arith.addf %63, %0 : vector<16x32xf32>
    %cst_19 = arith.constant dense<0.000000e+00> : vector<16xf32>
    %65 = vector.multi_reduction <add>, %64, %cst_19 [1] : vector<16x32xf32> to vector<16xf32>
    %66 = vector.shape_cast %65 : vector<16xf32> to vector<16x1xf32>
    %cst_20 = arith.constant 3.200000e+01 : f32
    %67 = vector.broadcast %cst_20 : f32 to vector<16x1xf32>
    %68 = arith.divf %66, %67 : vector<16x1xf32>
    %69 = vector.broadcast %68 : vector<16x1xf32> to vector<16x32xf32>
    %70 = arith.subf %64, %69 : vector<16x32xf32>
    %71 = arith.mulf %70, %70 : vector<16x32xf32>
    %cst_21 = arith.constant dense<0.000000e+00> : vector<16xf32>
    %72 = vector.multi_reduction <add>, %71, %cst_21 [1] : vector<16x32xf32> to vector<16xf32>
    %73 = vector.shape_cast %72 : vector<16xf32> to vector<16x1xf32>
    %cst_22 = arith.constant 3.200000e+01 : f32
    %74 = vector.broadcast %cst_22 : f32 to vector<16x1xf32>
    %75 = arith.divf %73, %74 : vector<16x1xf32>
    %76 = vector.broadcast %68 : vector<16x1xf32> to vector<16x32xf32>
    %77 = arith.subf %64, %76 : vector<16x32xf32>
    %cst_23 = arith.constant 9.99999974E-6 : f32
    %78 = vector.broadcast %cst_23 : f32 to vector<16x1xf32>
    %79 = arith.addf %75, %78 : vector<16x1xf32>
    %80 = math.rsqrt %79 : vector<16x1xf32>
    %81 = vector.broadcast %80 : vector<16x1xf32> to vector<16x32xf32>
    %82 = arith.mulf %77, %81 : vector<16x32xf32>
    %c0_24 = arith.constant 0 : index
    %c0_25 = arith.constant 0 : index
    %83 = vector.load %arg3[%c0_24, %c0_25] : memref<32x128xf32, #tpu.memory_space<vmem>>, vector<32x128xf32>
    %cst_26 = arith.constant dense<0.000000e+00> : vector<16x128xf32>
    %84 = tpu.matmul %82, %83, %cst_26 {dimension_numbers = #tpu.dot_dimension_numbers<[1], [0], [0], [1], [0, 0, 1, 1], [], []>} : vector<16x32xf32>, vector<32x128xf32>, vector<16x128xf32> -> vector<16x128xf32>
    %85 = vector.broadcast %3 : vector<1x128xf32> to vector<16x128xf32>
    %86 = arith.addf %84, %85 : vector<16x128xf32>
    %cst_27 = arith.constant 5.000000e-01 : f32
    %87 = vector.broadcast %cst_27 : f32 to vector<16x128xf32>
    %88 = arith.mulf %87, %86 : vector<16x128xf32>
    %cst_28 = arith.constant 0.636619746 : f32
    %89 = math.sqrt %cst_28 : f32
    %90 = arith.mulf %86, %86 : vector<16x128xf32>
    %91 = arith.mulf %86, %90 : vector<16x128xf32>
    %cst_29 = arith.constant 4.471500e-02 : f32
    %92 = vector.broadcast %cst_29 : f32 to vector<16x128xf32>
    %93 = arith.mulf %92, %91 : vector<16x128xf32>
    %94 = arith.addf %86, %93 : vector<16x128xf32>
    %95 = vector.broadcast %89 : f32 to vector<16x128xf32>
    %96 = arith.mulf %95, %94 : vector<16x128xf32>
    %97 = math.tanh %96 : vector<16x128xf32>
    %cst_30 = arith.constant 1.000000e+00 : f32
    %98 = vector.broadcast %cst_30 : f32 to vector<16x128xf32>
    %99 = arith.addf %98, %97 : vector<16x128xf32>
    %100 = arith.mulf %88, %99 : vector<16x128xf32>
    %c0_31 = arith.constant 0 : index
    %c0_32 = arith.constant 0 : index
    %101 = vector.load %arg4[%c0_31, %c0_32] : memref<128x32xf32, #tpu.memory_space<vmem>>, vector<128x32xf32>
    %cst_33 = arith.constant dense<0.000000e+00> : vector<16x32xf32>
    %102 = tpu.matmul %100, %101, %cst_33 {dimension_numbers = #tpu.dot_dimension_numbers<[1], [0], [0], [1], [0, 0, 1, 1], [], []>} : vector<16x128xf32>, vector<128x32xf32>, vector<16x32xf32> -> vector<16x32xf32>
    %103 = vector.broadcast %5 : vector<1x32xf32> to vector<16x32xf32>
    %104 = arith.addf %102, %103 : vector<16x32xf32>
    %105 = arith.addf %104, %64 : vector<16x32xf32>
    %c0_34 = arith.constant 0 : index
    %c0_35 = arith.constant 0 : index
    %106 = vector.load %arg6[%c0_34, %c0_35] : memref<16x32xf32, #tpu.memory_space<vmem>>, vector<16x32xf32>
    tpu.vector_store %arg6[%c0_34, %c0_35], %105 {strides = array<i32>} : memref<16x32xf32, #tpu.memory_space<vmem>>, vector<16x32xf32>,
    return
  }
}

</mosaic_0001>

<llo_original>
// kernel: tpu_custom_call.1
$region0: #{tpu_custom_call.1}
  #allocation0 [shape = 'u32[]', space=smem, size = 0x4, offset = 0x4, fixed_abs, tag = 'smem constant byte address 0x4 - core index']
  #allocation1 [shape = 'u32[72,128]{1,0:T(1,128)}', space=vmem, size = 0x9000, scoped, tag = 'internal scratch']
  %s0 = inlined_call_operand.vmem [shape: f32[16,32], index: 0, kind: input, shape index: {}]
  %s1 = inlined_call_operand.vmem [shape: f32[32,96], index: 1, kind: input, shape index: {}]
  %s2 = inlined_call_operand.vmem [shape: f32[32,32], index: 2, kind: input, shape index: {}]
  %s3 = inlined_call_operand.vmem [shape: f32[32,128], index: 3, kind: input, shape index: {}]
  %s4 = inlined_call_operand.vmem [shape: f32[128,32], index: 4, kind: input, shape index: {}]
  %s5 = inlined_call_operand.vmem [shape: f32[4,128], index: 5, kind: input, shape index: {}]
  %s6 = inlined_call_operand.hbm [shape: f32[16,32], index: 6, kind: output, shape index: {}]
  %s7 = sld [smem:[#allocation0]]
  $region34: #{tpu_custom_call.1} parent=0
    _
  %s9 = ssub.s32 1, %s7
  %s10 = scalar_select 0, %s9, %s7
  $region1: #{tpu_custom_call.1} parent=0
    #allocation2 [shape = 'u8[8192]{0}', space=vmem, size = 0x2000, scoped, tag = 'output window, operand 0, single buffered']
    #allocation3 [shape = 's32[1]{0}', space=sflag, size = 0x4, scoped, tag = 'scoped memory for tpu_custom_call.1']
    %11 = vsyncpa [#allocation3], 0
    // Predicated region
    $region2: #{tpu_custom_call.1} parent=1 // pred_check
      _
    $region3: #{tpu_custom_call.1} parent=1 // pred_check_branch
      %13 = sbr.rel (0) target = $region5
    $region4: #{tpu_custom_call.1} parent=1 // pred_region
      _
    $region5: #{tpu_custom_call.1} parent=1 // pred_fallthru
      _
    // Predicated region
    $region6: #{tpu_custom_call.1} parent=1 // pred_check
      _
    $region7: #{tpu_custom_call.1} parent=1 // pred_check_branch
      %15 = sbr.rel (0) target = $region9
    $region8: #{tpu_custom_call.1} parent=1 // pred_region
      _
    $region9: #{tpu_custom_call.1} parent=1 // pred_fallthru
      _
    // Predicated region
    $region10: #{tpu_custom_call.1} parent=1 // pred_check
      _
    $region11: #{tpu_custom_call.1} parent=1 // pred_check_branch
      %17 = sbr.rel (0) target = $region13
    $region12: #{tpu_custom_call.1} parent=1 // pred_region
      _
    $region13: #{tpu_custom_call.1} parent=1 // pred_fallthru
      _
    // Predicated region
    $region14: #{tpu_custom_call.1} parent=1 // pred_check
      _
    $region15: #{tpu_custom_call.1} parent=1 // pred_check_branch
      %19 = sbr.rel (0) target = $region17
    $region16: #{tpu_custom_call.1} parent=1 // pred_region
      _
    $region17: #{tpu_custom_call.1} parent=1 // pred_fallthru
      _
    // Predicated region
    $region18: #{tpu_custom_call.1} parent=1 // pred_check
      _
    $region19: #{tpu_custom_call.1} parent=1 // pred_check_branch
      %21 = sbr.rel (0) target = $region21
    $region20: #{tpu_custom_call.1} parent=1 // pred_region
      _
    $region21: #{tpu_custom_call.1} parent=1 // pred_fallthru
      _
    // Predicated region
    $region22: #{tpu_custom_call.1} parent=1 // pred_check
      _
    $region23: #{tpu_custom_call.1} parent=1 // pred_check_branch
      %23 = sbr.rel (0) target = $region25
    $region24: #{tpu_custom_call.1} parent=1 // pred_region
      _
    $region25: #{tpu_custom_call.1} parent=1 // pred_fallthru
      _
    %v24 = vld [vmem:[%s0] sm:$0xff]
    %v25 = vld [vmem:[%s0 + $0x8] sm:$0xff]
    %v26 = vld [vmem:[%s5] sm:$0xf]
    %vm27 = vcmask 261120
    %v28 = vsel %vm27, %v24, 0.0
    %29 = vadd.xlane.f32.xlu0 %v28
    %v30 = vpop.xlane.xlu0 %29
    %v31 = vsel %vm27, %v25, 0.0
    %32 = vadd.xlane.f32.xlu0 %v31
    %v33 = vpop.xlane.xlu0 %32
    %v34 = vrcp.pop 32.0
    %v35 = vmul.f32 32.0, %v34
    %v36 = vsub.f32 1.0, %v35
    %v37 = vmul.f32 %v34, %v36
    %v38 = vadd.f32 %v34, %v37
    %vm39 = vweird.f32 %v34
    %v40 = vsel %vm39, %v34, %v38
    %v41 = vmul.f32 %v30, %v40
    %v42 = vmul.f32 %v33, %v40
    %v43 = vsub.f32 %v24, %v41
    %v44 = vsub.f32 %v25, %v42
    %v45 = vmul.f32 %v43, %v43
    %v46 = vmul.f32 %v44, %v44
    %v47 = vsel %vm27, %v45, 0.0
    %48 = vadd.xlane.f32.xlu0 %v47
    %v49 = vpop.xlane.xlu0 %48
    %v50 = vsel %vm27, %v46, 0.0
    %51 = vadd.xlane.f32.xlu0 %v50
    %v52 = vpop.xlane.xlu0 %51
    %v53 = vmul.f32 %v49, %v40
    %v54 = vmul.f32 %v52, %v40
    %v55 = vadd.f32 %v53, 1e-05
    %v56 = vadd.f32 %v54, 1e-05
    %v57 = vrsqrt.pop %v55
    %v58 = vmul.f32 %v57, %v55
    %v59 = vmul.f32 %v58, %v57
    %v60 = vmul.f32 0.5, %v59
    %v61 = vsub.f32 1.5, %v60
    %v62 = vmul.f32 %v57, %v61
    %vm63 = vweird.f32 %v55
    %vm64 = vweird.f32 %v57
    %vm65 = vmor %vm63, %vm64
    %v66 = vsel %vm65, %v57, %v62
    %v67 = vrsqrt.pop %v56
    %v68 = vmul.f32 %v67, %v56
    %v69 = vmul.f32 %v68, %v67
    %v70 = vmul.f32 0.5, %v69
    %v71 = vsub.f32 1.5, %v70
    %v72 = vmul.f32 %v67, %v71
    %vm73 = vweird.f32 %v56
    %vm74 = vweird.f32 %v67
    %vm75 = vmor %vm73, %vm74
    %v76 = vsel %vm75, %v67, %v72
    %v77 = vmul.f32 %v43, %v66
    %v78 = vmul.f32 %v44, %v76
    %v79 = vld [vmem:[%s1] sm:$0xff]
    %v80 = vld [vmem:[%s1 + $0x8] sm:$0xff]
    %v81 = vld [vmem:[%s1 + $0x10] sm:$0xff]
    %v82 = vld [vmem:[%s1 + $0x18] sm:$0xff]
    %v83 = vperm.slane %v26, 0
    %v85 = vsel %vm27, %v77, 0
    %v88 = vsel %vm27, %v78, 0
    %90 = vmatpush.msra.mxu0 0.0
    %91 = vmatpush.msra.mxu0 0.0
    %92 = vmatpush.msra.mxu0 0.0
    %93 = vmatpush.msra.mxu0 0.0
    %94 = vmatpush.msra.mxu0 0.0
    %95 = vmatpush.msra.mxu0 0.0
    %96 = vmatpush.msra.mxu0 0.0
    %97 = vmatpush.msra.mxu0 0.0
    %98 = vmatpush.msra.mxu0 0.0
    %99 = vmatpush.msra.mxu0 0.0
    %100 = vmatpush.msra.mxu0 0.0
    %101 = vmatpush.msra.mxu0 0.0
    %102 = vmatpush.msra.mxu0 %v82
    %103 = vmatpush.msra.mxu0 %v81
    %104 = vmatpush.msra.mxu0 %v80
    %105 = vmatpush.msra.mxu0 %v79
    %106 = vmatmul.f32.gmra.mxu0 %v85
    %v107 = vpop.f32.mrf.mxu0
    %v108 = vadd.f32 %v83, %v107
    %109 = vmatmul.f32.gmra.mxu0 %v88
    %v110 = vpop.f32.mrf.mxu0
    %v111 = vadd.f32 %v83, %v110
    %112 = vdwg.mxu0
    %115 = vrot.lane.b32.xlu0 %v108, 120
    %v116 = vpop.permute.xlu0 %115
    %117 = vrot.lane.b32.xlu0 %v111, 120
    %v118 = vpop.permute.xlu0 %117
    %119 = vrot.lane.b32.xlu0 %v108, 112
    %v120 = vpop.permute.xlu0 %119
    %121 = vrot.lane.b32.xlu0 %v111, 112
    %v122 = vpop.permute.xlu0 %121
    %123 = vrot.lane.b32.xlu0 %v108, 104
    %v124 = vpop.permute.xlu0 %123
    %125 = vrot.lane.b32.xlu0 %v111, 104
    %v126 = vpop.permute.xlu0 %125
    %v127 = vlaneseq
    %v128 = vshrl.u32 %v127, 7
    %v129 = vadd.s32 %v128, 8
    %v130 = vlaneseq
    %v131 = vand.u32 %v130, 127
    %v132 = vxor.u32 %v128, %v131
    %v133 = vxor.u32 %v129, %v131
    %vm134 = vcmp.lt.s32.totalorder %v132, 8
    %vm135 = vcmp.lt.s32.totalorder %v133, 8
    %vm136 = vcmp.le.s32.totalorder %v131, %v128
    %vm137 = vcmp.le.s32.totalorder %v131, %v129
    %vm138 = vmand %vm136, %vm134
    %vm139 = vmand %vm137, %vm135
    %v140 = vsel %vm138, 0.0, -1e+30
    %v141 = vsel %vm139, 0.0, -1e+30
    %142 = vrot.lane.b32.xlu0 %v108, 96
    %v143 = vpop.permute.xlu0 %142
    %144 = vrot.lane.b32.xlu0 %v111, 96
    %v145 = vpop.permute.xlu0 %144
    %146 = vrot.lane.b32.xlu0 %v116, 96
    %v147 = vpop.permute.xlu0 %146
    %148 = vrot.lane.b32.xlu0 %v118, 96
    %v149 = vpop.permute.xlu0 %148
    %150 = vrot.lane.b32.xlu0 %v120, 96
    %v151 = vpop.permute.xlu0 %150
    %152 = vrot.lane.b32.xlu0 %v122, 96
    %v153 = vpop.permute.xlu0 %152
    %154 = vrot.lane.b32.xlu0 %v124, 96
    %v155 = vpop.permute.xlu0 %154
    %156 = vrot.lane.b32.xlu0 %v126, 96
    %v157 = vpop.permute.xlu0 %156
    %166 = vxpose.xlu0.b32.start [1/16] %v143, 128
    %167 = vxpose.xlu0.b32.cont [2/16] %v145, 128
    %168 = vxpose.xlu0.b32.cont [3/16] 0.0, 128
    %169 = vxpose.xlu0.b32.cont [4/16] 0.0, 128
    %170 = vxpose.xlu0.b32.cont [5/16] 0.0, 128
    %171 = vxpose.xlu0.b32.cont [6/16] 0.0, 128
    %172 = vxpose.xlu0.b32.cont [7/16] 0.0, 128
    %173 = vxpose.xlu0.b32.cont [8/16] 0.0, 128
    %174 = vxpose.xlu0.b32.cont [9/16] 0.0, 128
    %175 = vxpose.xlu0.b32.cont [10/16] 0.0, 128
    %176 = vxpose.xlu0.b32.cont [11/16] 0.0, 128
    %177 = vxpose.xlu0.b32.cont [12/16] 0.0, 128
    %178 = vxpose.xlu0.b32.cont [13/16] 0.0, 128
    %179 = vxpose.xlu0.b32.cont [14/16] 0.0, 128
    %180 = vxpose.xlu0.b32.cont [15/16] 0.0, 128
    %181 = vxpose.xlu0.b32.end [16/16] 0.0, 128
    %v182 = vpop.trf.xlu0
    %v183 = vpop.trf.xlu0
    %v184 = vpop.trf.xlu0
    %v185 = vpop.trf.xlu0
    %v186 = vpop.trf.xlu0
    %v187 = vpop.trf.xlu0
    %v188 = vpop.trf.xlu0
    %v189 = vpop.trf.xlu0
    %v190 = vpop.trf.xlu0
    %v191 = vpop.trf.xlu0
    %v192 = vpop.trf.xlu0
    %v193 = vpop.trf.xlu0
    %v194 = vpop.trf.xlu0
    %v195 = vpop.trf.xlu0
    %v196 = vpop.trf.xlu0
    %v197 = vpop.trf.xlu0
    %198 = vxpose.xlu0.b32.start [1/16] %v147, 128
    %199 = vxpose.xlu0.b32.cont [2/16] %v149, 128
    %200 = vxpose.xlu0.b32.cont [3/16] 0.0, 128
    %201 = vxpose.xlu0.b32.cont [4/16] 0.0, 128
    %202 = vxpose.xlu0.b32.cont [5/16] 0.0, 128
    %203 = vxpose.xlu0.b32.cont [6/16] 0.0, 128
    %204 = vxpose.xlu0.b32.cont [7/16] 0.0, 128
    %205 = vxpose.xlu0.b32.cont [8/16] 0.0, 128
    %206 = vxpose.xlu0.b32.cont [9/16] 0.0, 128
    %207 = vxpose.xlu0.b32.cont [10/16] 0.0, 128
    %208 = vxpose.xlu0.b32.cont [11/16] 0.0, 128
    %209 = vxpose.xlu0.b32.cont [12/16] 0.0, 128
    %210 = vxpose.xlu0.b32.cont [13/16] 0.0, 128
    %211 = vxpose.xlu0.b32.cont [14/16] 0.0, 128
    %212 = vxpose.xlu0.b32.cont [15/16] 0.0, 128
    %213 = vxpose.xlu0.b32.end [16/16] 0.0, 128
    %v214 = vpop.trf.xlu0
    %v215 = vpop.trf.xlu0
    %v216 = vpop.trf.xlu0
    %v217 = vpop.trf.xlu0
    %v218 = vpop.trf.xlu0
    %v219 = vpop.trf.xlu0
    %v220 = vpop.trf.xlu0
    %v221 = vpop.trf.xlu0
    %v222 = vpop.trf.xlu0
    %v223 = vpop.trf.xlu0
    %v224 = vpop.trf.xlu0
    %v225 = vpop.trf.xlu0
    %v226 = vpop.trf.xlu0
    %v227 = vpop.trf.xlu0
    %v228 = vpop.trf.xlu0
    %v229 = vpop.trf.xlu0
    %230 = vxpose.xlu0.b32.start [1/16] %v151, 128
    %231 = vxpose.xlu0.b32.cont [2/16] %v153, 128
    %232 = vxpose.xlu0.b32.cont [3/16] 0.0, 128
    %233 = vxpose.xlu0.b32.cont [4/16] 0.0, 128
    %234 = vxpose.xlu0.b32.cont [5/16] 0.0, 128
    %235 = vxpose.xlu0.b32.cont [6/16] 0.0, 128
    %236 = vxpose.xlu0.b32.cont [7/16] 0.0, 128
    %237 = vxpose.xlu0.b32.cont [8/16] 0.0, 128
    %238 = vxpose.xlu0.b32.cont [9/16] 0.0, 128
    %239 = vxpose.xlu0.b32.cont [10/16] 0.0, 128
    %240 = vxpose.xlu0.b32.cont [11/16] 0.0, 128
    %241 = vxpose.xlu0.b32.cont [12/16] 0.0, 128
    %242 = vxpose.xlu0.b32.cont [13/16] 0.0, 128
    %243 = vxpose.xlu0.b32.cont [14/16] 0.0, 128
    %244 = vxpose.xlu0.b32.cont [15/16] 0.0, 128
    %245 = vxpose.xlu0.b32.end [16/16] 0.0, 128
    %v246 = vpop.trf.xlu0
    %v247 = vpop.trf.xlu0
    %v248 = vpop.trf.xlu0
    %v249 = vpop.trf.xlu0
    %v250 = vpop.trf.xlu0
    %v251 = vpop.trf.xlu0
    %v252 = vpop.trf.xlu0
    %v253 = vpop.trf.xlu0
    %v254 = vpop.trf.xlu0
    %v255 = vpop.trf.xlu0
    %v256 = vpop.trf.xlu0
    %v257 = vpop.trf.xlu0
    %v258 = vpop.trf.xlu0
    %v259 = vpop.trf.xlu0
    %v260 = vpop.trf.xlu0
    %v261 = vpop.trf.xlu0
    %262 = vxpose.xlu0.b32.start [1/16] %v155, 128
    %263 = vxpose.xlu0.b32.cont [2/16] %v157, 128
    %264 = vxpose.xlu0.b32.cont [3/16] 0.0, 128
    %265 = vxpose.xlu0.b32.cont [4/16] 0.0, 128
    %266 = vxpose.xlu0.b32.cont [5/16] 0.0, 128
    %267 = vxpose.xlu0.b32.cont [6/16] 0.0, 128
    %268 = vxpose.xlu0.b32.cont [7/16] 0.0, 128
    %269 = vxpose.xlu0.b32.cont [8/16] 0.0, 128
    %270 = vxpose.xlu0.b32.cont [9/16] 0.0, 128
    %271 = vxpose.xlu0.b32.cont [10/16] 0.0, 128
    %272 = vxpose.xlu0.b32.cont [11/16] 0.0, 128
    %273 = vxpose.xlu0.b32.cont [12/16] 0.0, 128
    %274 = vxpose.xlu0.b32.cont [13/16] 0.0, 128
    %275 = vxpose.xlu0.b32.cont [14/16] 0.0, 128
    %276 = vxpose.xlu0.b32.cont [15/16] 0.0, 128
    %277 = vxpose.xlu0.b32.end [16/16] 0.0, 128
    %v278 = vpop.trf.xlu0
    %v279 = vpop.trf.xlu0
    %v280 = vpop.trf.xlu0
    %v281 = vpop.trf.xlu0
    %v282 = vpop.trf.xlu0
    %v283 = vpop.trf.xlu0
    %v284 = vpop.trf.xlu0
    %v285 = vpop.trf.xlu0
    %v286 = vpop.trf.xlu0
    %v287 = vpop.trf.xlu0
    %v288 = vpop.trf.xlu0
    %v289 = vpop.trf.xlu0
    %v290 = vpop.trf.xlu0
    %v291 = vpop.trf.xlu0
    %v292 = vpop.trf.xlu0
    %v293 = vpop.trf.xlu0
    %vm294 = vcmask 64512
    %v295 = vsel %vm294, %v108, 0
    %v297 = vsel %vm294, %v111, 0
    %299 = vmatpush.msra.mxu0 0.0
    %300 = vmatpush.msra.mxu0 0.0
    %301 = vmatpush.msra.mxu0 0.0
    %302 = vmatpush.msra.mxu0 0.0
    %303 = vmatpush.msra.mxu0 0.0
    %304 = vmatpush.msra.mxu0 0.0
    %305 = vmatpush.msra.mxu0 0.0
    %306 = vmatpush.msra.mxu0 0.0
    %307 = vmatpush.msra.mxu0 0.0
    %308 = vmatpush.msra.mxu0 0.0
    %309 = vmatpush.msra.mxu0 0.0
    %310 = vmatpush.msra.mxu0 0.0
    %311 = vmatpush.msra.mxu0 0.0
    %312 = vmatpush.msra.mxu0 0.0
    %313 = vmatpush.msra.mxu0 0.0
    %314 = vmatpush.msra.mxu0 %v182
    %315 = vmatmul.f32.gmra.mxu0 %v295
    %v316 = vpop.f32.mrf.mxu0
    %v317 = vadd.f32 %v140, %v316
    %318 = vmatmul.f32.gmra.mxu0 %v297
    %v319 = vpop.f32.mrf.mxu0
    %v320 = vadd.f32 %v141, %v319
    %321 = vdwg.mxu0
    %v322 = vsel %vm294, %v116, 0
    %v324 = vsel %vm294, %v118, 0
    %326 = vmatpush.msra.mxu0 0.0
    %327 = vmatpush.msra.mxu0 0.0
    %328 = vmatpush.msra.mxu0 0.0
    %329 = vmatpush.msra.mxu0 0.0
    %330 = vmatpush.msra.mxu0 0.0
    %331 = vmatpush.msra.mxu0 0.0
    %332 = vmatpush.msra.mxu0 0.0
    %333 = vmatpush.msra.mxu0 0.0
    %334 = vmatpush.msra.mxu0 0.0
    %335 = vmatpush.msra.mxu0 0.0
    %336 = vmatpush.msra.mxu0 0.0
    %337 = vmatpush.msra.mxu0 0.0
    %338 = vmatpush.msra.mxu0 0.0
    %339 = vmatpush.msra.mxu0 0.0
    %340 = vmatpush.msra.mxu0 0.0
    %341 = vmatpush.msra.mxu0 %v214
    %342 = vmatmul.f32.gmra.mxu0 %v322
    %v343 = vpop.f32.mrf.mxu0
    %v344 = vadd.f32 %v140, %v343
    %345 = vmatmul.f32.gmra.mxu0 %v324
    %v346 = vpop.f32.mrf.mxu0
    %v347 = vadd.f32 %v141, %v346
    %348 = vdwg.mxu0
    %v349 = vsel %vm294, %v120, 0
    %v351 = vsel %vm294, %v122, 0
    %353 = vmatpush.msra.mxu0 0.0
    %354 = vmatpush.msra.mxu0 0.0
    %355 = vmatpush.msra.mxu0 0.0
    %356 = vmatpush.msra.mxu0 0.0
    %357 = vmatpush.msra.mxu0 0.0
    %358 = vmatpush.msra.mxu0 0.0
    %359 = vmatpush.msra.mxu0 0.0
    %360 = vmatpush.msra.mxu0 0.0
    %361 = vmatpush.msra.mxu0 0.0
    %362 = vmatpush.msra.mxu0 0.0
    %363 = vmatpush.msra.mxu0 0.0
    %364 = vmatpush.msra.mxu0 0.0
    %365 = vmatpush.msra.mxu0 0.0
    %366 = vmatpush.msra.mxu0 0.0
    %367 = vmatpush.msra.mxu0 0.0
    %368 = vmatpush.msra.mxu0 %v246
    %369 = vmatmul.f32.gmra.mxu0 %v349
    %v370 = vpop.f32.mrf.mxu0
    %v371 = vadd.f32 %v140, %v370
    %372 = vmatmul.f32.gmra.mxu0 %v351
    %v373 = vpop.f32.mrf.mxu0
    %v374 = vadd.f32 %v141, %v373
    %375 = vdwg.mxu0
    %v376 = vsel %vm294, %v124, 0
    %v378 = vsel %vm294, %v126, 0
    %380 = vmatpush.msra.mxu0 0.0
    %381 = vmatpush.msra.mxu0 0.0
    %382 = vmatpush.msra.mxu0 0.0
    %383 = vmatpush.msra.mxu0 0.0
    %384 = vmatpush.msra.mxu0 0.0
    %385 = vmatpush.msra.mxu0 0.0
    %386 = vmatpush.msra.mxu0 0.0
    %387 = vmatpush.msra.mxu0 0.0
    %388 = vmatpush.msra.mxu0 0.0
    %389 = vmatpush.msra.mxu0 0.0
    %390 = vmatpush.msra.mxu0 0.0
    %391 = vmatpush.msra.mxu0 0.0
    %392 = vmatpush.msra.mxu0 0.0
    %393 = vmatpush.msra.mxu0 0.0
    %394 = vmatpush.msra.mxu0 0.0
    %395 = vmatpush.msra.mxu0 %v278
    %396 = vmatmul.f32.gmra.mxu0 %v376
    %v397 = vpop.f32.mrf.mxu0
    %v398 = vadd.f32 %v140, %v397
    %399 = vmatmul.f32.gmra.mxu0 %v378
    %v400 = vpop.f32.mrf.mxu0
    %v401 = vadd.f32 %v141, %v400
    %402 = vdwg.mxu0
    %vm403 = vcmask 130048
    %v404 = vsel %vm403, %v317, -inf
    %405 = vmax.xlane.f32.xlu0 %v404
    %v406 = vpop.xlane.xlu0 %405
    %v407 = vsel %vm403, %v320, -inf
    %408 = vmax.xlane.f32.xlu0 %v407
    %v409 = vpop.xlane.xlu0 %408
    %v410 = vsel %vm403, %v344, -inf
    %411 = vmax.xlane.f32.xlu0 %v410
    %v412 = vpop.xlane.xlu0 %411
    %v413 = vsel %vm403, %v347, -inf
    %414 = vmax.xlane.f32.xlu0 %v413
    %v415 = vpop.xlane.xlu0 %414
    %v416 = vsel %vm403, %v371, -inf
    %417 = vmax.xlane.f32.xlu0 %v416
    %v418 = vpop.xlane.xlu0 %417
    %v419 = vsel %vm403, %v374, -inf
    %420 = vmax.xlane.f32.xlu0 %v419
    %v421 = vpop.xlane.xlu0 %420
    %v422 = vsel %vm403, %v398, -inf
    %423 = vmax.xlane.f32.xlu0 %v422
    %v424 = vpop.xlane.xlu0 %423
    %v425 = vsel %vm403, %v401, -inf
    %426 = vmax.xlane.f32.xlu0 %v425
    %v427 = vpop.xlane.xlu0 %426
    %v428 = vsub.f32 %v317, %v406
    %v429 = vsub.f32 %v320, %v409
    %v430 = vsub.f32 %v344, %v412
    %v431 = vsub.f32 %v347, %v415
    %v432 = vsub.f32 %v371, %v418
    %v433 = vsub.f32 %v374, %v421
    %v434 = vsub.f32 %v398, %v424
    %v435 = vsub.f32 %v401, %v427
    %v436 = vmul.f32 %v428, 1.442695
    %v437 = vpow.pop %v436
    %v438 = vmul.f32 %v429, 1.442695
    %v439 = vpow.pop %v438
    %v440 = vmul.f32 %v430, 1.442695
    %v441 = vpow.pop %v440
    %v442 = vmul.f32 %v431, 1.442695
    %v443 = vpow.pop %v442
    %v444 = vmul.f32 %v432, 1.442695
    %v445 = vpow.pop %v444
    %v446 = vmul.f32 %v433, 1.442695
    %v447 = vpow.pop %v446
    %v448 = vmul.f32 %v434, 1.442695
    %v449 = vpow.pop %v448
    %v450 = vmul.f32 %v435, 1.442695
    %v451 = vpow.pop %v450
    %v452 = vsel %vm403, %v437, 0.0
    %453 = vadd.xlane.f32.xlu0 %v452
    %v454 = vpop.xlane.xlu0 %453
    %v455 = vsel %vm403, %v439, 0.0
    %456 = vadd.xlane.f32.xlu0 %v455
    %v457 = vpop.xlane.xlu0 %456
    %v458 = vsel %vm403, %v441, 0.0
    %459 = vadd.xlane.f32.xlu0 %v458
    %v460 = vpop.xlane.xlu0 %459
    %v461 = vsel %vm403, %v443, 0.0
    %462 = vadd.xlane.f32.xlu0 %v461
    %v463 = vpop.xlane.xlu0 %462
    %v464 = vsel %vm403, %v445, 0.0
    %465 = vadd.xlane.f32.xlu0 %v464
    %v466 = vpop.xlane.xlu0 %465
    %v467 = vsel %vm403, %v447, 0.0
    %468 = vadd.xlane.f32.xlu0 %v467
    %v469 = vpop.xlane.xlu0 %468
    %v470 = vsel %vm403, %v449, 0.0
    %471 = vadd.xlane.f32.xlu0 %v470
    %v472 = vpop.xlane.xlu0 %471
    %v473 = vsel %vm403, %v451, 0.0
    %474 = vadd.xlane.f32.xlu0 %v473
    %v475 = vpop.xlane.xlu0 %474
    %v476 = vrcp.pop %v454
    %v477 = vmul.f32 %v454, %v476
    %v478 = vsub.f32 1.0, %v477
    %v479 = vmul.f32 %v476, %v478
    %v480 = vadd.f32 %v476, %v479
    %vm481 = vweird.f32 %v454
    %vm482 = vweird.f32 %v476
    %vm483 = vmor %vm481, %vm482
    %v484 = vsel %vm483, %v476, %v480
    %v485 = vand.u32 2147483647, %v454
    %vm486 = vcmp.eq.f32.partialorder %v485, 8.507059e+37
    %v487 = vand.u32 %v454, 2147483648
    %v488 = vor.u32 1.1754944e-38, %v487
    %v489 = vsel %vm486, %v488, %v484
    %v490 = vmul.f32 %v437, %v489
    %v491 = vrcp.pop %v457
    %v492 = vmul.f32 %v457, %v491
    %v493 = vsub.f32 1.0, %v492
    %v494 = vmul.f32 %v491, %v493
    %v495 = vadd.f32 %v491, %v494
    %vm496 = vweird.f32 %v457
    %vm497 = vweird.f32 %v491
    %vm498 = vmor %vm496, %vm497
    %v499 = vsel %vm498, %v491, %v495
    %v500 = vand.u32 2147483647, %v457
    %vm501 = vcmp.eq.f32.partialorder %v500, 8.507059e+37
    %v502 = vand.u32 %v457, 2147483648
    %v503 = vor.u32 1.1754944e-38, %v502
    %v504 = vsel %vm501, %v503, %v499
    %v505 = vmul.f32 %v439, %v504
    %v506 = vrcp.pop %v460
    %v507 = vmul.f32 %v460, %v506
    %v508 = vsub.f32 1.0, %v507
    %v509 = vmul.f32 %v506, %v508
    %v510 = vadd.f32 %v506, %v509
    %vm511 = vweird.f32 %v460
    %vm512 = vweird.f32 %v506
    %vm513 = vmor %vm511, %vm512
    %v514 = vsel %vm513, %v506, %v510
    %v515 = vand.u32 2147483647, %v460
    %vm516 = vcmp.eq.f32.partialorder %v515, 8.507059e+37
    %v517 = vand.u32 %v460, 2147483648
    %v518 = vor.u32 1.1754944e-38, %v517
    %v519 = vsel %vm516, %v518, %v514
    %v520 = vmul.f32 %v441, %v519
    %v521 = vrcp.pop %v463
    %v522 = vmul.f32 %v463, %v521
    %v523 = vsub.f32 1.0, %v522
    %v524 = vmul.f32 %v521, %v523
    %v525 = vadd.f32 %v521, %v524
    %vm526 = vweird.f32 %v463
    %vm527 = vweird.f32 %v521
    %vm528 = vmor %vm526, %vm527
    %v529 = vsel %vm528, %v521, %v525
    %v530 = vand.u32 2147483647, %v463
    %vm531 = vcmp.eq.f32.partialorder %v530, 8.507059e+37
    %v532 = vand.u32 %v463, 2147483648
    %v533 = vor.u32 1.1754944e-38, %v532
    %v534 = vsel %vm531, %v533, %v529
    %v535 = vmul.f32 %v443, %v534
    %v536 = vrcp.pop %v466
    %v537 = vmul.f32 %v466, %v536
    %v538 = vsub.f32 1.0, %v537
    %v539 = vmul.f32 %v536, %v538
    %v540 = vadd.f32 %v536, %v539
    %vm541 = vweird.f32 %v466
    %vm542 = vweird.f32 %v536
    %vm543 = vmor %vm541, %vm542
    %v544 = vsel %vm543, %v536, %v540
    %v545 = vand.u32 2147483647, %v466
    %vm546 = vcmp.eq.f32.partialorder %v545, 8.507059e+37
    %v547 = vand.u32 %v466, 2147483648
    %v548 = vor.u32 1.1754944e-38, %v547
    %v549 = vsel %vm546, %v548, %v544
    %v550 = vmul.f32 %v445, %v549
    %v551 = vrcp.pop %v469
    %v552 = vmul.f32 %v469, %v551
    %v553 = vsub.f32 1.0, %v552
    %v554 = vmul.f32 %v551, %v553
    %v555 = vadd.f32 %v551, %v554
    %vm556 = vweird.f32 %v469
    %vm557 = vweird.f32 %v551
    %vm558 = vmor %vm556, %vm557
    %v559 = vsel %vm558, %v551, %v555
    %v560 = vand.u32 2147483647, %v469
    %vm561 = vcmp.eq.f32.partialorder %v560, 8.507059e+37
    %v562 = vand.u32 %v469, 2147483648
    %v563 = vor.u32 1.1754944e-38, %v562
    %v564 = vsel %vm561, %v563, %v559
    %v565 = vmul.f32 %v447, %v564
    %v566 = vrcp.pop %v472
    %v567 = vmul.f32 %v472, %v566
    %v568 = vsub.f32 1.0, %v567
    %v569 = vmul.f32 %v566, %v568
    %v570 = vadd.f32 %v566, %v569
    %vm571 = vweird.f32 %v472
    %vm572 = vweird.f32 %v566
    %vm573 = vmor %vm571, %vm572
    %v574 = vsel %vm573, %v566, %v570
    %v575 = vand.u32 2147483647, %v472
    %vm576 = vcmp.eq.f32.partialorder %v575, 8.507059e+37
    %v577 = vand.u32 %v472, 2147483648
    %v578 = vor.u32 1.1754944e-38, %v577
    %v579 = vsel %vm576, %v578, %v574
    %v580 = vmul.f32 %v449, %v579
    %v581 = vrcp.pop %v475
    %v582 = vmul.f32 %v475, %v581
    %v583 = vsub.f32 1.0, %v582
    %v584 = vmul.f32 %v581, %v583
    %v585 = vadd.f32 %v581, %v584
    %vm586 = vweird.f32 %v475
    %vm587 = vweird.f32 %v581
    %vm588 = vmor %vm586, %vm587
    %v589 = vsel %vm588, %v581, %v585
    %v590 = vand.u32 2147483647, %v475
    %vm591 = vcmp.eq.f32.partialorder %v590, 8.507059e+37
    %v592 = vand.u32 %v475, 2147483648
    %v593 = vor.u32 1.1754944e-38, %v592
    %v594 = vsel %vm591, %v593, %v589
    %v595 = vmul.f32 %v451, %v594
    %596 = vrot.lane.b32.xlu0 %v108, 64
    %v597 = vpop.permute.xlu0 %596
    %598 = vrot.lane.b32.xlu0 %v111, 64
    %v599 = vpop.permute.xlu0 %598
    %600 = vrot.lane.b32.xlu0 %v116, 64
    %v601 = vpop.permute.xlu0 %600
    %602 = vrot.lane.b32.xlu0 %v118, 64
    %v603 = vpop.permute.xlu0 %602
    %604 = vrot.lane.b32.xlu0 %v120, 64
    %v605 = vpop.permute.xlu0 %604
    %606 = vrot.lane.b32.xlu0 %v122, 64
    %v607 = vpop.permute.xlu0 %606
    %608 = vrot.lane.b32.xlu0 %v124, 64
    %v609 = vpop.permute.xlu0 %608
    %610 = vrot.lane.b32.xlu0 %v126, 64
    %v611 = vpop.permute.xlu0 %610
    %620 = vxpose.xlu0.b32.start [1/16] %v597, 128
    %621 = vxpose.xlu0.b32.cont [2/16] %v599, 128
    %622 = vxpose.xlu0.b32.cont [3/16] 0.0, 128
    %623 = vxpose.xlu0.b32.cont [4/16] 0.0, 128
    %624 = vxpose.xlu0.b32.cont [5/16] 0.0, 128
    %625 = vxpose.xlu0.b32.cont [6/16] 0.0, 128
    %626 = vxpose.xlu0.b32.cont [7/16] 0.0, 128
    %627 = vxpose.xlu0.b32.cont [8/16] 0.0, 128
    %628 = vxpose.xlu0.b32.cont [9/16] 0.0, 128
    %629 = vxpose.xlu0.b32.cont [10/16] 0.0, 128
    %630 = vxpose.xlu0.b32.cont [11/16] 0.0, 128
    %631 = vxpose.xlu0.b32.cont [12/16] 0.0, 128
    %632 = vxpose.xlu0.b32.cont [13/16] 0.0, 128
    %633 = vxpose.xlu0.b32.cont [14/16] 0.0, 128
    %634 = vxpose.xlu0.b32.cont [15/16] 0.0, 128
    %635 = vxpose.xlu0.b32.end [16/16] 0.0, 128
    %v636 = vpop.trf.xlu0
    %v637 = vpop.trf.xlu0
    %v638 = vpop.trf.xlu0
    %v639 = vpop.trf.xlu0
    %v640 = vpop.trf.xlu0
    %v641 = vpop.trf.xlu0
    %v642 = vpop.trf.xlu0
    %v643 = vpop.trf.xlu0
    %v644 = vpop.trf.xlu0
    %v645 = vpop.trf.xlu0
    %v646 = vpop.trf.xlu0
    %v647 = vpop.trf.xlu0
    %v648 = vpop.trf.xlu0
    %v649 = vpop.trf.xlu0
    %v650 = vpop.trf.xlu0
    %v651 = vpop.trf.xlu0
    %652 = vxpose.xlu0.b32.start [1/16] %v601, 128
    %653 = vxpose.xlu0.b32.cont [2/16] %v603, 128
    %654 = vxpose.xlu0.b32.cont [3/16] 0.0, 128
    %655 = vxpose.xlu0.b32.cont [4/16] 0.0, 128
    %656 = vxpose.xlu0.b32.cont [5/16] 0.0, 128
    %657 = vxpose.xlu0.b32.cont [6/16] 0.0, 128
    %658 = vxpose.xlu0.b32.cont [7/16] 0.0, 128
    %659 = vxpose.xlu0.b32.cont [8/16] 0.0, 128
    %660 = vxpose.xlu0.b32.cont [9/16] 0.0, 128
    %661 = vxpose.xlu0.b32.cont [10/16] 0.0, 128
    %662 = vxpose.xlu0.b32.cont [11/16] 0.0, 128
    %663 = vxpose.xlu0.b32.cont [12/16] 0.0, 128
    %664 = vxpose.xlu0.b32.cont [13/16] 0.0, 128
    %665 = vxpose.xlu0.b32.cont [14/16] 0.0, 128
    %666 = vxpose.xlu0.b32.cont [15/16] 0.0, 128
    %667 = vxpose.xlu0.b32.end [16/16] 0.0, 128
    %v668 = vpop.trf.xlu0
    %v669 = vpop.trf.xlu0
    %v670 = vpop.trf.xlu0
    %v671 = vpop.trf.xlu0
    %v672 = vpop.trf.xlu0
    %v673 = vpop.trf.xlu0
    %v674 = vpop.trf.xlu0
    %v675 = vpop.trf.xlu0
    %v676 = vpop.trf.xlu0
    %v677 = vpop.trf.xlu0
    %v678 = vpop.trf.xlu0
    %v679 = vpop.trf.xlu0
    %v680 = vpop.trf.xlu0
    %v681 = vpop.trf.xlu0
    %v682 = vpop.trf.xlu0
    %v683 = vpop.trf.xlu0
    %684 = vxpose.xlu0.b32.start [1/16] %v605, 128
    %685 = vxpose.xlu0.b32.cont [2/16] %v607, 128
    %686 = vxpose.xlu0.b32.cont [3/16] 0.0, 128
    %687 = vxpose.xlu0.b32.cont [4/16] 0.0, 128
    %688 = vxpose.xlu0.b32.cont [5/16] 0.0, 128
    %689 = vxpose.xlu0.b32.cont [6/16] 0.0, 128
    %690 = vxpose.xlu0.b32.cont [7/16] 0.0, 128
    %691 = vxpose.xlu0.b32.cont [8/16] 0.0, 128
    %692 = vxpose.xlu0.b32.cont [9/16] 0.0, 128
    %693 = vxpose.xlu0.b32.cont [10/16] 0.0, 128
    %694 = vxpose.xlu0.b32.cont [11/16] 0.0, 128
    %695 = vxpose.xlu0.b32.cont [12/16] 0.0, 128
    %696 = vxpose.xlu0.b32.cont [13/16] 0.0, 128
    %697 = vxpose.xlu0.b32.cont [14/16] 0.0, 128
    %698 = vxpose.xlu0.b32.cont [15/16] 0.0, 128
    %699 = vxpose.xlu0.b32.end [16/16] 0.0, 128
    %v700 = vpop.trf.xlu0
    %v701 = vpop.trf.xlu0
    %v702 = vpop.trf.xlu0
    %v703 = vpop.trf.xlu0
    %v704 = vpop.trf.xlu0
    %v705 = vpop.trf.xlu0
    %v706 = vpop.trf.xlu0
    %v707 = vpop.trf.xlu0
    %v708 = vpop.trf.xlu0
    %v709 = vpop.trf.xlu0
    %v710 = vpop.trf.xlu0
    %v711 = vpop.trf.xlu0
    %v712 = vpop.trf.xlu0
    %v713 = vpop.trf.xlu0
    %v714 = vpop.trf.xlu0
    %v715 = vpop.trf.xlu0
    %716 = vxpose.xlu0.b32.start [1/16] %v609, 128
    %717 = vxpose.xlu0.b32.cont [2/16] %v611, 128
    %718 = vxpose.xlu0.b32.cont [3/16] 0.0, 128
    %719 = vxpose.xlu0.b32.cont [4/16] 0.0, 128
    %720 = vxpose.xlu0.b32.cont [5/16] 0.0, 128
    %721 = vxpose.xlu0.b32.cont [6/16] 0.0, 128
    %722 = vxpose.xlu0.b32.cont [7/16] 0.0, 128
    %723 = vxpose.xlu0.b32.cont [8/16] 0.0, 128
    %724 = vxpose.xlu0.b32.cont [9/16] 0.0, 128
    %725 = vxpose.xlu0.b32.cont [10/16] 0.0, 128
    %726 = vxpose.xlu0.b32.cont [11/16] 0.0, 128
    %727 = vxpose.xlu0.b32.cont [12/16] 0.0, 128
    %728 = vxpose.xlu0.b32.cont [13/16] 0.0, 128
    %729 = vxpose.xlu0.b32.cont [14/16] 0.0, 128
    %730 = vxpose.xlu0.b32.cont [15/16] 0.0, 128
    %731 = vxpose.xlu0.b32.end [16/16] 0.0, 128
    %v732 = vpop.trf.xlu0
    %v733 = vpop.trf.xlu0
    %v734 = vpop.trf.xlu0
    %v735 = vpop.trf.xlu0
    %v736 = vpop.trf.xlu0
    %v737 = vpop.trf.xlu0
    %v738 = vpop.trf.xlu0
    %v739 = vpop.trf.xlu0
    %v740 = vpop.trf.xlu0
    %v741 = vpop.trf.xlu0
    %v742 = vpop.trf.xlu0
    %v743 = vpop.trf.xlu0
    %v744 = vpop.trf.xlu0
    %v745 = vpop.trf.xlu0
    %v746 = vpop.trf.xlu0
    %v747 = vpop.trf.xlu0
    %v749 = vsel %vm403, %v636, 0
    %v752 = vsel %vm403, %v490, 0
    %v755 = vsel %vm403, %v505, 0
    %757 = vmatpush.xpose.msra.mxu0 0.0
    %758 = vmatpush.xpose.msra.mxu0 0.0
    %759 = vmatpush.xpose.msra.mxu0 0.0
    %760 = vmatpush.xpose.msra.mxu0 0.0
    %761 = vmatpush.xpose.msra.mxu0 0.0
    %762 = vmatpush.xpose.msra.mxu0 0.0
    %763 = vmatpush.xpose.msra.mxu0 0.0
    %764 = vmatpush.xpose.msra.mxu0 0.0
    %765 = vmatpush.xpose.msra.mxu0 0.0
    %766 = vmatpush.xpose.msra.mxu0 0.0
    %767 = vmatpush.xpose.msra.mxu0 0.0
    %768 = vmatpush.xpose.msra.mxu0 0.0
    %769 = vmatpush.xpose.msra.mxu0 0.0
    %770 = vmatpush.xpose.msra.mxu0 0.0
    %771 = vmatpush.xpose.msra.mxu0 %v755
    %772 = vmatpush.xpose.msra.mxu0 %v752
    %773 = vmatmul.f32.gmra.mxu0 %v749
    %v774 = vpop.f32.mrf.mxu0
    %v775 = vadd.f32 0.0, %v774
    %776 = vdwg.mxu0
    %v778 = vsel %vm403, %v668, 0
    %v781 = vsel %vm403, %v520, 0
    %v784 = vsel %vm403, %v535, 0
    %786 = vmatpush.xpose.msra.mxu0 0.0
    %787 = vmatpush.xpose.msra.mxu0 0.0
    %788 = vmatpush.xpose.msra.mxu0 0.0
    %789 = vmatpush.xpose.msra.mxu0 0.0
    %790 = vmatpush.xpose.msra.mxu0 0.0
    %791 = vmatpush.xpose.msra.mxu0 0.0
    %792 = vmatpush.xpose.msra.mxu0 0.0
    %793 = vmatpush.xpose.msra.mxu0 0.0
    %794 = vmatpush.xpose.msra.mxu0 0.0
    %795 = vmatpush.xpose.msra.mxu0 0.0
    %796 = vmatpush.xpose.msra.mxu0 0.0
    %797 = vmatpush.xpose.msra.mxu0 0.0
    %798 = vmatpush.xpose.msra.mxu0 0.0
    %799 = vmatpush.xpose.msra.mxu0 0.0
    %800 = vmatpush.xpose.msra.mxu0 %v784
    %801 = vmatpush.xpose.msra.mxu0 %v781
    %802 = vmatmul.f32.gmra.mxu0 %v778
    %v803 = vpop.f32.mrf.mxu0
    %v804 = vadd.f32 0.0, %v803
    %805 = vdwg.mxu0
    %v807 = vsel %vm403, %v700, 0
    %v810 = vsel %vm403, %v550, 0
    %v813 = vsel %vm403, %v565, 0
    %815 = vmatpush.xpose.msra.mxu0 0.0
    %816 = vmatpush.xpose.msra.mxu0 0.0
    %817 = vmatpush.xpose.msra.mxu0 0.0
    %818 = vmatpush.xpose.msra.mxu0 0.0
    %819 = vmatpush.xpose.msra.mxu0 0.0
    %820 = vmatpush.xpose.msra.mxu0 0.0
    %821 = vmatpush.xpose.msra.mxu0 0.0
    %822 = vmatpush.xpose.msra.mxu0 0.0
    %823 = vmatpush.xpose.msra.mxu0 0.0
    %824 = vmatpush.xpose.msra.mxu0 0.0
    %825 = vmatpush.xpose.msra.mxu0 0.0
    %826 = vmatpush.xpose.msra.mxu0 0.0
    %827 = vmatpush.xpose.msra.mxu0 0.0
    %828 = vmatpush.xpose.msra.mxu0 0.0
    %829 = vmatpush.xpose.msra.mxu0 %v813
    %830 = vmatpush.xpose.msra.mxu0 %v810
    %831 = vmatmul.f32.gmra.mxu0 %v807
    %v832 = vpop.f32.mrf.mxu0
    %v833 = vadd.f32 0.0, %v832
    %834 = vdwg.mxu0
    %v836 = vsel %vm403, %v732, 0
    %v839 = vsel %vm403, %v580, 0
    %v842 = vsel %vm403, %v595, 0
    %844 = vmatpush.xpose.msra.mxu0 0.0
    %845 = vmatpush.xpose.msra.mxu0 0.0
    %846 = vmatpush.xpose.msra.mxu0 0.0
    %847 = vmatpush.xpose.msra.mxu0 0.0
    %848 = vmatpush.xpose.msra.mxu0 0.0
    %849 = vmatpush.xpose.msra.mxu0 0.0
    %850 = vmatpush.xpose.msra.mxu0 0.0
    %851 = vmatpush.xpose.msra.mxu0 0.0
    %852 = vmatpush.xpose.msra.mxu0 0.0
    %853 = vmatpush.xpose.msra.mxu0 0.0
    %854 = vmatpush.xpose.msra.mxu0 0.0
    %855 = vmatpush.xpose.msra.mxu0 0.0
    %856 = vmatpush.xpose.msra.mxu0 0.0
    %857 = vmatpush.xpose.msra.mxu0 0.0
    %858 = vmatpush.xpose.msra.mxu0 %v842
    %859 = vmatpush.xpose.msra.mxu0 %v839
    %860 = vmatmul.f32.gmra.mxu0 %v836
    %v861 = vpop.f32.mrf.mxu0
    %v862 = vadd.f32 0.0, %v861
    %863 = vdwg.mxu0
    %864 = vxpose.xlu0.b32.start [1/16] %v775, 128
    %865 = vxpose.xlu0.b32.cont [2/16] 0.0, 128
    %866 = vxpose.xlu0.b32.cont [3/16] 0.0, 128
    %867 = vxpose.xlu0.b32.cont [4/16] 0.0, 128
    %868 = vxpose.xlu0.b32.cont [5/16] 0.0, 128
    %869 = vxpose.xlu0.b32.cont [6/16] 0.0, 128
    %870 = vxpose.xlu0.b32.cont [7/16] 0.0, 128
    %871 = vxpose.xlu0.b32.cont [8/16] 0.0, 128
    %872 = vxpose.xlu0.b32.cont [9/16] 0.0, 128
    %873 = vxpose.xlu0.b32.cont [10/16] 0.0, 128
    %874 = vxpose.xlu0.b32.cont [11/16] 0.0, 128
    %875 = vxpose.xlu0.b32.cont [12/16] 0.0, 128
    %876 = vxpose.xlu0.b32.cont [13/16] 0.0, 128
    %877 = vxpose.xlu0.b32.cont [14/16] 0.0, 128
    %878 = vxpose.xlu0.b32.cont [15/16] 0.0, 128
    %879 = vxpose.xlu0.b32.end [16/16] 0.0, 128
    %v880 = vpop.trf.xlu0
    %v881 = vpop.trf.xlu0
    %v882 = vpop.trf.xlu0
    %v883 = vpop.trf.xlu0
    %v884 = vpop.trf.xlu0
    %v885 = vpop.trf.xlu0
    %v886 = vpop.trf.xlu0
    %v887 = vpop.trf.xlu0
    %v888 = vpop.trf.xlu0
    %v889 = vpop.trf.xlu0
    %v890 = vpop.trf.xlu0
    %v891 = vpop.trf.xlu0
    %v892 = vpop.trf.xlu0
    %v893 = vpop.trf.xlu0
    %v894 = vpop.trf.xlu0
    %v895 = vpop.trf.xlu0
    %896 = vxpose.xlu0.b32.start [1/16] %v804, 128
    %897 = vxpose.xlu0.b32.cont [2/16] 0.0, 128
    %898 = vxpose.xlu0.b32.cont [3/16] 0.0, 128
    %899 = vxpose.xlu0.b32.cont [4/16] 0.0, 128
    %900 = vxpose.xlu0.b32.cont [5/16] 0.0, 128
    %901 = vxpose.xlu0.b32.cont [6/16] 0.0, 128
    %902 = vxpose.xlu0.b32.cont [7/16] 0.0, 128
    %903 = vxpose.xlu0.b32.cont [8/16] 0.0, 128
    %904 = vxpose.xlu0.b32.cont [9/16] 0.0, 128
    %905 = vxpose.xlu0.b32.cont [10/16] 0.0, 128
    %906 = vxpose.xlu0.b32.cont [11/16] 0.0, 128
    %907 = vxpose.xlu0.b32.cont [12/16] 0.0, 128
    %908 = vxpose.xlu0.b32.cont [13/16] 0.0, 128
    %909 = vxpose.xlu0.b32.cont [14/16] 0.0, 128
    %910 = vxpose.xlu0.b32.cont [15/16] 0.0, 128
    %911 = vxpose.xlu0.b32.end [16/16] 0.0, 128
    %v912 = vpop.trf.xlu0
    %v913 = vpop.trf.xlu0
    %v914 = vpop.trf.xlu0
    %v915 = vpop.trf.xlu0
    %v916 = vpop.trf.xlu0
    %v917 = vpop.trf.xlu0
    %v918 = vpop.trf.xlu0
    %v919 = vpop.trf.xlu0
    %v920 = vpop.trf.xlu0
    %v921 = vpop.trf.xlu0
    %v922 = vpop.trf.xlu0
    %v923 = vpop.trf.xlu0
    %v924 = vpop.trf.xlu0
    %v925 = vpop.trf.xlu0
    %v926 = vpop.trf.xlu0
    %v927 = vpop.trf.xlu0
    %928 = vxpose.xlu0.b32.start [1/16] %v833, 128
    %929 = vxpose.xlu0.b32.cont [2/16] 0.0, 128
    %930 = vxpose.xlu0.b32.cont [3/16] 0.0, 128
    %931 = vxpose.xlu0.b32.cont [4/16] 0.0, 128
    %932 = vxpose.xlu0.b32.cont [5/16] 0.0, 128
    %933 = vxpose.xlu0.b32.cont [6/16] 0.0, 128
    %934 = vxpose.xlu0.b32.cont [7/16] 0.0, 128
    %935 = vxpose.xlu0.b32.cont [8/16] 0.0, 128
    %936 = vxpose.xlu0.b32.cont [9/16] 0.0, 128
    %937 = vxpose.xlu0.b32.cont [10/16] 0.0, 128
    %938 = vxpose.xlu0.b32.cont [11/16] 0.0, 128
    %939 = vxpose.xlu0.b32.cont [12/16] 0.0, 128
    %940 = vxpose.xlu0.b32.cont [13/16] 0.0, 128
    %941 = vxpose.xlu0.b32.cont [14/16] 0.0, 128
    %942 = vxpose.xlu0.b32.cont [15/16] 0.0, 128
    %943 = vxpose.xlu0.b32.end [16/16] 0.0, 128
    %v944 = vpop.trf.xlu0
    %v945 = vpop.trf.xlu0
    %v946 = vpop.trf.xlu0
    %v947 = vpop.trf.xlu0
    %v948 = vpop.trf.xlu0
    %v949 = vpop.trf.xlu0
    %v950 = vpop.trf.xlu0
    %v951 = vpop.trf.xlu0
    %v952 = vpop.trf.xlu0
    %v953 = vpop.trf.xlu0
    %v954 = vpop.trf.xlu0
    %v955 = vpop.trf.xlu0
    %v956 = vpop.trf.xlu0
    %v957 = vpop.trf.xlu0
    %v958 = vpop.trf.xlu0
    %v959 = vpop.trf.xlu0
    %960 = vxpose.xlu0.b32.start [1/16] %v862, 128
    %961 = vxpose.xlu0.b32.cont [2/16] 0.0, 128
    %962 = vxpose.xlu0.b32.cont [3/16] 0.0, 128
    %963 = vxpose.xlu0.b32.cont [4/16] 0.0, 128
    %964 = vxpose.xlu0.b32.cont [5/16] 0.0, 128
    %965 = vxpose.xlu0.b32.cont [6/16] 0.0, 128
    %966 = vxpose.xlu0.b32.cont [7/16] 0.0, 128
    %967 = vxpose.xlu0.b32.cont [8/16] 0.0, 128
    %968 = vxpose.xlu0.b32.cont [9/16] 0.0, 128
    %969 = vxpose.xlu0.b32.cont [10/16] 0.0, 128
    %970 = vxpose.xlu0.b32.cont [11/16] 0.0, 128
    %971 = vxpose.xlu0.b32.cont [12/16] 0.0, 128
    %972 = vxpose.xlu0.b32.cont [13/16] 0.0, 128
    %973 = vxpose.xlu0.b32.cont [14/16] 0.0, 128
    %974 = vxpose.xlu0.b32.cont [15/16] 0.0, 128
    %975 = vxpose.xlu0.b32.end [16/16] 0.0, 128
    %v976 = vpop.trf.xlu0
    %v977 = vpop.trf.xlu0
    %v978 = vpop.trf.xlu0
    %v979 = vpop.trf.xlu0
    %v980 = vpop.trf.xlu0
    %v981 = vpop.trf.xlu0
    %v982 = vpop.trf.xlu0
    %v983 = vpop.trf.xlu0
    %v984 = vpop.trf.xlu0
    %v985 = vpop.trf.xlu0
    %v986 = vpop.trf.xlu0
    %v987 = vpop.trf.xlu0
    %v988 = vpop.trf.xlu0
    %v989 = vpop.trf.xlu0
    %v990 = vpop.trf.xlu0
    %v991 = vpop.trf.xlu0
    %v992 = vrot.slane %v944, 4
    %vm993 = vcmask 1047556
    %v994 = vsel %vm993, %v992, %v880
    %v995 = vrot.slane %v880, 4
    %v996 = vsel %vm993, %v944, %v995
    %v998 = vunpack.c.l.s4 1983009808
    %v999 = vunpack.c.0.s8 %v998
    %v1000 = vperm.slane %v994, %v999
    %v1002 = vunpack.c.l.s4 1983009808
    %v1003 = vunpack.c.0.s8 %v1002
    %v1004 = vperm.slane %v996, %v1003
    %v1005 = vrot.slane %v976, 4
    %v1006 = vsel %vm993, %v1005, %v912
    %v1007 = vrot.slane %v912, 4
    %v1008 = vsel %vm993, %v976, %v1007
    %v1010 = vunpack.c.l.s4 1983009808
    %v1011 = vunpack.c.0.s8 %v1010
    %v1012 = vperm.slane %v1006, %v1011
    %v1014 = vunpack.c.l.s4 1983009808
    %v1015 = vunpack.c.0.s8 %v1014
    %v1016 = vperm.slane %v1008, %v1015
    %v1017 = vrot.slane %v1012, 4
    %v1018 = vsel %vm993, %v1017, %v1000
    %v1019 = vrot.slane %v1000, 4
    %v1020 = vsel %vm993, %v1012, %v1019
    %v1022 = vunpack.c.l.s4 1934713408
    %v1023 = vunpack.c.0.s8 %v1022
    %v1024 = vperm.slane %v1018, %v1023
    %v1026 = vunpack.c.l.s4 1934713408
    %v1027 = vunpack.c.0.s8 %v1026
    %v1028 = vperm.slane %v1020, %v1027
    %v1029 = vrot.slane %v1016, 4
    %v1030 = vsel %vm993, %v1029, %v1004
    %v1031 = vrot.slane %v1004, 4
    %v1032 = vsel %vm993, %v1016, %v1031
    %v1034 = vunpack.c.l.s4 1934713408
    %v1035 = vunpack.c.0.s8 %v1034
    %v1036 = vperm.slane %v1030, %v1035
    %v1038 = vunpack.c.l.s4 1934713408
    %v1039 = vunpack.c.0.s8 %v1038
    %v1040 = vperm.slane %v1032, %v1039
    %v1041 = vrot.slane %v1024, 4
    %v1042 = vsel %vm993, 0.0, %v1041
    %v1043 = vrot.slane %v1028, 4
    %v1044 = vsel %vm993, 0.0, %v1043
    %v1045 = vrot.slane %v1036, 4
    %v1046 = vsel %vm993, 0.0, %v1045
    %v1047 = vrot.slane %v1040, 4
    %v1048 = vsel %vm993, 0.0, %v1047
    %v1049 = vrot.slane %v945, 4
    %v1050 = vsel %vm993, %v1049, %v881
    %v1051 = vrot.slane %v881, 4
    %v1052 = vsel %vm993, %v945, %v1051
    %v1054 = vunpack.c.l.s4 1983009808
    %v1055 = vunpack.c.0.s8 %v1054
    %v1056 = vperm.slane %v1050, %v1055
    %v1058 = vunpack.c.l.s4 1983009808
    %v1059 = vunpack.c.0.s8 %v1058
    %v1060 = vperm.slane %v1052, %v1059
    %v1061 = vrot.slane %v977, 4
    %v1062 = vsel %vm993, %v1061, %v913
    %v1063 = vrot.slane %v913, 4
    %v1064 = vsel %vm993, %v977, %v1063
    %v1066 = vunpack.c.l.s4 1983009808
    %v1067 = vunpack.c.0.s8 %v1066
    %v1068 = vperm.slane %v1062, %v1067
    %v1070 = vunpack.c.l.s4 1983009808
    %v1071 = vunpack.c.0.s8 %v1070
    %v1072 = vperm.slane %v1064, %v1071
    %v1073 = vrot.slane %v1068, 4
    %v1074 = vsel %vm993, %v1073, %v1056
    %v1075 = vrot.slane %v1056, 4
    %v1076 = vsel %vm993, %v1068, %v1075
    %v1078 = vunpack.c.l.s4 1934713408
    %v1079 = vunpack.c.0.s8 %v1078
    %v1080 = vperm.slane %v1074, %v1079
    %v1082 = vunpack.c.l.s4 1934713408
    %v1083 = vunpack.c.0.s8 %v1082
    %v1084 = vperm.slane %v1076, %v1083
    %v1085 = vrot.slane %v1072, 4
    %v1086 = vsel %vm993, %v1085, %v1060
    %v1087 = vrot.slane %v1060, 4
    %v1088 = vsel %vm993, %v1072, %v1087
    %v1090 = vunpack.c.l.s4 1934713408
    %v1091 = vunpack.c.0.s8 %v1090
    %v1092 = vperm.slane %v1086, %v1091
    %v1094 = vunpack.c.l.s4 1934713408
    %v1095 = vunpack.c.0.s8 %v1094
    %v1096 = vperm.slane %v1088, %v1095
    %v1097 = vrot.slane %v1080, 4
    %v1098 = vsel %vm993, 0.0, %v1097
    %v1099 = vrot.slane %v1084, 4
    %v1100 = vsel %vm993, 0.0, %v1099
    %v1101 = vrot.slane %v1092, 4
    %v1102 = vsel %vm993, 0.0, %v1101
    %v1103 = vrot.slane %v1096, 4
    %v1104 = vsel %vm993, 0.0, %v1103
    %v1105 = vsel %vm993, %v1043, %v1024
    %v1107 = vunpack.c.l.s4 1983009808
    %v1108 = vunpack.c.0.s8 %v1107
    %v1109 = vperm.slane %v1105, %v1108
    %v1110 = vrot.slane %v1044, 4
    %v1111 = vsel %vm993, %v1110, %v1042
    %v1113 = vunpack.c.l.s4 1983009808
    %v1114 = vunpack.c.0.s8 %v1113
    %v1115 = vperm.slane %v1111, %v1114
    %v1116 = vsel %vm993, %v1047, %v1036
    %v1118 = vunpack.c.l.s4 1983009808
    %v1119 = vunpack.c.0.s8 %v1118
    %v1120 = vperm.slane %v1116, %v1119
    %v1121 = vrot.slane %v1048, 4
    %v1122 = vsel %vm993, %v1121, %v1046
    %v1124 = vunpack.c.l.s4 1983009808
    %v1125 = vunpack.c.0.s8 %v1124
    %v1126 = vperm.slane %v1122, %v1125
    %v1127 = vrot.slane %v1115, 4
    %v1128 = vsel %vm993, %v1127, %v1109
    %v1129 = vrot.slane %v1109, 4
    %v1130 = vsel %vm993, %v1115, %v1129
    %v1132 = vunpack.c.l.s4 1934713408
    %v1133 = vunpack.c.0.s8 %v1132
    %v1134 = vperm.slane %v1128, %v1133
    %v1136 = vunpack.c.l.s4 1934713408
    %v1137 = vunpack.c.0.s8 %v1136
    %v1138 = vperm.slane %v1130, %v1137
    %v1139 = vrot.slane %v1126, 4
    %v1140 = vsel %vm993, %v1139, %v1120
    %v1141 = vrot.slane %v1120, 4
    %v1142 = vsel %vm993, %v1126, %v1141
    %v1144 = vunpack.c.l.s4 1934713408
    %v1145 = vunpack.c.0.s8 %v1144
    %v1146 = vperm.slane %v1140, %v1145
    %v1148 = vunpack.c.l.s4 1934713408
    %v1149 = vunpack.c.0.s8 %v1148
    %v1150 = vperm.slane %v1142, %v1149
    %v1151 = vrot.slane %v1146, 4
    %v1152 = vsel %vm993, %v1151, %v1134
    %v1153 = vrot.slane %v1134, 4
    %v1154 = vsel %vm993, %v1146, %v1153
    %v1155 = vrot.slane %v1150, 4
    %v1156 = vsel %vm993, %v1155, %v1138
    %v1157 = vrot.slane %v1138, 4
    %v1158 = vsel %vm993, %v1150, %v1157
    %v1159 = vsel %vm993, %v1099, %v1080
    %v1161 = vunpack.c.l.s4 1983009808
    %v1162 = vunpack.c.0.s8 %v1161
    %v1163 = vperm.slane %v1159, %v1162
    %v1164 = vrot.slane %v1100, 4
    %v1165 = vsel %vm993, %v1164, %v1098
    %v1167 = vunpack.c.l.s4 1983009808
    %v1168 = vunpack.c.0.s8 %v1167
    %v1169 = vperm.slane %v1165, %v1168
    %v1170 = vsel %vm993, %v1103, %v1092
    %v1172 = vunpack.c.l.s4 1983009808
    %v1173 = vunpack.c.0.s8 %v1172
    %v1174 = vperm.slane %v1170, %v1173
    %v1175 = vrot.slane %v1104, 4
    %v1176 = vsel %vm993, %v1175, %v1102
    %v1178 = vunpack.c.l.s4 1983009808
    %v1179 = vunpack.c.0.s8 %v1178
    %v1180 = vperm.slane %v1176, %v1179
    %v1181 = vrot.slane %v1169, 4
    %v1182 = vsel %vm993, %v1181, %v1163
    %v1183 = vrot.slane %v1163, 4
    %v1184 = vsel %vm993, %v1169, %v1183
    %v1186 = vunpack.c.l.s4 1934713408
    %v1187 = vunpack.c.0.s8 %v1186
    %v1188 = vperm.slane %v1182, %v1187
    %v1190 = vunpack.c.l.s4 1934713408
    %v1191 = vunpack.c.0.s8 %v1190
    %v1192 = vperm.slane %v1184, %v1191
    %v1193 = vrot.slane %v1180, 4
    %v1194 = vsel %vm993, %v1193, %v1174
    %v1195 = vrot.slane %v1174, 4
    %v1196 = vsel %vm993, %v1180, %v1195
    %v1198 = vunpack.c.l.s4 1934713408
    %v1199 = vunpack.c.0.s8 %v1198
    %v1200 = vperm.slane %v1194, %v1199
    %v1202 = vunpack.c.l.s4 1934713408
    %v1203 = vunpack.c.0.s8 %v1202
    %v1204 = vperm.slane %v1196, %v1203
    %v1205 = vrot.slane %v1200, 4
    %v1206 = vsel %vm993, %v1205, %v1188
    %v1207 = vrot.slane %v1188, 4
    %v1208 = vsel %vm993, %v1200, %v1207
    %v1209 = vrot.slane %v1204, 4
    %v1210 = vsel %vm993, %v1209, %v1192
    %v1211 = vrot.slane %v1192, 4
    %v1212 = vsel %vm993, %v1204, %v1211
    %1215 = vrot.lane.b32.xlu0 %v1154, 8
    %v1216 = vpop.permute.xlu0 %1215
    %1217 = vrot.lane.b32.xlu0 %v1208, 8
    %v1218 = vpop.permute.xlu0 %1217
    %1223 = vrot.lane.b32.xlu0 %v1156, 16
    %v1224 = vpop.permute.xlu0 %1223
    %1225 = vrot.lane.b32.xlu0 %v1210, 16
    %v1226 = vpop.permute.xlu0 %1225
    %1231 = vrot.lane.b32.xlu0 %v1158, 24
    %v1232 = vpop.permute.xlu0 %1231
    %1233 = vrot.lane.b32.xlu0 %v1212, 24
    %v1234 = vpop.permute.xlu0 %1233
    %v1237 = vsel %vm294, %v1152, %v1216
    %v1238 = vsel %vm294, %v1206, %v1218
    %v1239 = vsel %vm403, %v1237, %v1224
    %v1240 = vsel %vm403, %v1238, %v1226
    %vm1241 = vcmask 195584
    %v1242 = vsel %vm1241, %v1239, %v1232
    %v1243 = vsel %vm1241, %v1240, %v1234
    %v1244 = vld [vmem:[%s2] sm:$0xff]
    %v1245 = vld [vmem:[%s2 + $0x8] sm:$0xff]
    %v1246 = vld [vmem:[%s2 + $0x10] sm:$0xff]
    %v1247 = vld [vmem:[%s2 + $0x18] sm:$0xff]
    %v1248 = vperm.slane %v26, 2
    %v1250 = vsel %vm27, %v1242, 0
    %v1253 = vsel %vm27, %v1243, 0
    %1255 = vmatpush.msra.mxu0 0.0
    %1256 = vmatpush.msra.mxu0 0.0
    %1257 = vmatpush.msra.mxu0 0.0
    %1258 = vmatpush.msra.mxu0 0.0
    %1259 = vmatpush.msra.mxu0 0.0
    %1260 = vmatpush.msra.mxu0 0.0
    %1261 = vmatpush.msra.mxu0 0.0
    %1262 = vmatpush.msra.mxu0 0.0
    %1263 = vmatpush.msra.mxu0 0.0
    %1264 = vmatpush.msra.mxu0 0.0
    %1265 = vmatpush.msra.mxu0 0.0
    %1266 = vmatpush.msra.mxu0 0.0
    %1267 = vmatpush.msra.mxu0 %v1247
    %1268 = vmatpush.msra.mxu0 %v1246
    %1269 = vmatpush.msra.mxu0 %v1245
    %1270 = vmatpush.msra.mxu0 %v1244
    %1271 = vmatmul.f32.gmra.mxu0 %v1250
    %v1272 = vpop.f32.mrf.mxu0
    %v1273 = vadd.f32 %v1248, %v1272
    %1274 = vmatmul.f32.gmra.mxu0 %v1253
    %v1275 = vpop.f32.mrf.mxu0
    %v1276 = vadd.f32 %v1248, %v1275
    %1277 = vdwg.mxu0
    %v1278 = vadd.f32 %v1273, %v24
    %v1279 = vadd.f32 %v1276, %v25
    %v1280 = vsel %vm27, %v1278, 0.0
    %1281 = vadd.xlane.f32.xlu0 %v1280
    %v1282 = vpop.xlane.xlu0 %1281
    %v1283 = vsel %vm27, %v1279, 0.0
    %1284 = vadd.xlane.f32.xlu0 %v1283
    %v1285 = vpop.xlane.xlu0 %1284
    %v1286 = vmul.f32 %v1282, %v40
    %v1287 = vmul.f32 %v1285, %v40
    %v1288 = vsub.f32 %v1278, %v1286
    %v1289 = vsub.f32 %v1279, %v1287
    %v1290 = vmul.f32 %v1288, %v1288
    %v1291 = vmul.f32 %v1289, %v1289
    %v1292 = vsel %vm27, %v1290, 0.0
    %1293 = vadd.xlane.f32.xlu0 %v1292
    %v1294 = vpop.xlane.xlu0 %1293
    %v1295 = vsel %vm27, %v1291, 0.0
    %1296 = vadd.xlane.f32.xlu0 %v1295
    %v1297 = vpop.xlane.xlu0 %1296
    %v1298 = vmul.f32 %v1294, %v40
    %v1299 = vmul.f32 %v1297, %v40
    %v1300 = vadd.f32 %v1298, 1e-05
    %v1301 = vadd.f32 %v1299, 1e-05
    %v1302 = vrsqrt.pop %v1300
    %v1303 = vmul.f32 %v1302, %v1300
    %v1304 = vmul.f32 %v1303, %v1302
    %v1305 = vmul.f32 0.5, %v1304
    %v1306 = vsub.f32 1.5, %v1305
    %v1307 = vmul.f32 %v1302, %v1306
    %vm1308 = vweird.f32 %v1300
    %vm1309 = vweird.f32 %v1302
    %vm1310 = vmor %vm1308, %vm1309
    %v1311 = vsel %vm1310, %v1302, %v1307
    %v1312 = vrsqrt.pop %v1301
    %v1313 = vmul.f32 %v1312, %v1301
    %v1314 = vmul.f32 %v1313, %v1312
    %v1315 = vmul.f32 0.5, %v1314
    %v1316 = vsub.f32 1.5, %v1315
    %v1317 = vmul.f32 %v1312, %v1316
    %vm1318 = vweird.f32 %v1301
    %vm1319 = vweird.f32 %v1312
    %vm1320 = vmor %vm1318, %vm1319
    %v1321 = vsel %vm1320, %v1312, %v1317
    %v1322 = vmul.f32 %v1288, %v1311
    %v1323 = vmul.f32 %v1289, %v1321
    %v1324 = vld [vmem:[%s3] sm:$0xff]
    %v1325 = vld [vmem:[%s3 + $0x8] sm:$0xff]
    %v1326 = vld [vmem:[%s3 + $0x10] sm:$0xff]
    %v1327 = vld [vmem:[%s3 + $0x18] sm:$0xff]
    %v1328 = vperm.slane %v26, 1
    %v1330 = vsel %vm27, %v1322, 0
    %v1333 = vsel %vm27, %v1323, 0
    %1335 = vmatpush.msra.mxu0 0.0
    %1336 = vmatpush.msra.mxu0 0.0
    %1337 = vmatpush.msra.mxu0 0.0
    %1338 = vmatpush.msra.mxu0 0.0
    %1339 = vmatpush.msra.mxu0 0.0
    %1340 = vmatpush.msra.mxu0 0.0
    %1341 = vmatpush.msra.mxu0 0.0
    %1342 = vmatpush.msra.mxu0 0.0
    %1343 = vmatpush.msra.mxu0 0.0
    %1344 = vmatpush.msra.mxu0 0.0
    %1345 = vmatpush.msra.mxu0 0.0
    %1346 = vmatpush.msra.mxu0 0.0
    %1347 = vmatpush.msra.mxu0 %v1327
    %1348 = vmatpush.msra.mxu0 %v1326
    %1349 = vmatpush.msra.mxu0 %v1325
    %1350 = vmatpush.msra.mxu0 %v1324
    %1351 = vmatmul.f32.gmra.mxu0 %v1330
    %v1352 = vpop.f32.mrf.mxu0
    %v1353 = vadd.f32 %v1328, %v1352
    %1354 = vmatmul.f32.gmra.mxu0 %v1333
    %v1355 = vpop.f32.mrf.mxu0
    %v1356 = vadd.f32 %v1328, %v1355
    %1357 = vdwg.mxu0
    %v1358 = vmul.f32 %v1353, 0.5
    %v1359 = vmul.f32 %v1356, 0.5
    %v1360 = vmul.f32 %v1353, %v1353
    %v1361 = vmul.f32 %v1356, %v1356
    %v1362 = vmul.f32 %v1353, %v1360
    %v1363 = vmul.f32 %v1356, %v1361
    %v1364 = vmul.f32 %v1362, 0.044715
    %v1365 = vmul.f32 %v1363, 0.044715
    %v1366 = vadd.f32 %v1353, %v1364
    %v1367 = vadd.f32 %v1356, %v1365
    %v1368 = vmul.f32 %v1366, 0.7978845
    %v1369 = vmul.f32 %v1367, 0.7978845
    %v1370 = vtanh.pop %v1368
    %v1371 = vtanh.pop %v1369
    %v1372 = vadd.f32 %v1370, 1.0
    %v1373 = vadd.f32 %v1371, 1.0
    %v1374 = vmul.f32 %v1358, %v1372
    %v1375 = vmul.f32 %v1359, %v1373
    %v1376 = vld [vmem:[%s4] sm:$0xff]
    %v1377 = vld [vmem:[%s4 + $0x8] sm:$0xff]
    %v1378 = vld [vmem:[%s4 + $0x10] sm:$0xff]
    %v1379 = vld [vmem:[%s4 + $0x18] sm:$0xff]
    %v1380 = vld [vmem:[%s4 + $0x20] sm:$0xff]
    %v1381 = vld [vmem:[%s4 + $0x28] sm:$0xff]
    %v1382 = vld [vmem:[%s4 + $0x30] sm:$0xff]
    %v1383 = vld [vmem:[%s4 + $0x38] sm:$0xff]
    %v1384 = vld [vmem:[%s4 + $0x40] sm:$0xff]
    %v1385 = vld [vmem:[%s4 + $0x48] sm:$0xff]
    %v1386 = vld [vmem:[%s4 + $0x50] sm:$0xff]
    %v1387 = vld [vmem:[%s4 + $0x58] sm:$0xff]
    %v1388 = vld [vmem:[%s4 + $0x60] sm:$0xff]
    %v1389 = vld [vmem:[%s4 + $0x68] sm:$0xff]
    %v1390 = vld [vmem:[%s4 + $0x70] sm:$0xff]
    %v1391 = vld [vmem:[%s4 + $0x78] sm:$0xff]
    %v1392 = vperm.slane %v26, 3
    %1393 = vmatpush.msra.mxu0 %v1391
    %1394 = vmatpush.msra.mxu0 %v1390
    %1395 = vmatpush.msra.mxu0 %v1389
    %1396 = vmatpush.msra.mxu0 %v1388
    %1397 = vmatpush.msra.mxu0 %v1387
    %1398 = vmatpush.msra.mxu0 %v1386
    %1399 = vmatpush.msra.mxu0 %v1385
    %1400 = vmatpush.msra.mxu0 %v1384
    %1401 = vmatpush.msra.mxu0 %v1383
    %1402 = vmatpush.msra.mxu0 %v1382
    %1403 = vmatpush.msra.mxu0 %v1381
    %1404 = vmatpush.msra.mxu0 %v1380
    %1405 = vmatpush.msra.mxu0 %v1379
    %1406 = vmatpush.msra.mxu0 %v1378
    %1407 = vmatpush.msra.mxu0 %v1377
    %1408 = vmatpush.msra.mxu0 %v1376
    %1409 = vmatmul.f32.gmra.mxu0 %v1374
    %v1410 = vpop.f32.mrf.mxu0
    %v1411 = vadd.f32 %v1392, %v1410
    %1412 = vmatmul.f32.gmra.mxu0 %v1375
    %v1413 = vpop.f32.mrf.mxu0
    %v1414 = vadd.f32 %v1392, %v1413
    %1415 = vdwg.mxu0
    %v1416 = vadd.f32 %v1411, %v1278
    %v1417 = vadd.f32 %v1414, %v1279
    %1418 = vst.msk [vmem:[#allocation2] sm:$0xff] %vm27, %v1416
    %1419 = vst.msk [vmem:[#allocation2 + $0x8] sm:$0xff] %vm27, %v1417
    // Predicated region
    $region26: #{tpu_custom_call.1} parent=1 // pred_check
      _
    $region27: #{tpu_custom_call.1} parent=1 // pred_check_branch
      %1421 = sbr.rel (0) target = $region29
    $region28: #{tpu_custom_call.1} parent=1 // pred_region
      %1423 = vsyncadd [#allocation3], 0
      %s1424 = sshll.u32 [#allocation2], 4
      %s1425 = int_to_ptr.vmem [resolvable:$true] %s1424
      %s1426 = sshll.u32 %s6, 4
      %s1427 = int_to_ptr.hbm [resolvable:$true] %s1426
      %1432 = dma.vmem_to_hbm [thread:$0]  %s1425, 256, %s1427, [#allocation3], 128, 128, 8
    $region29: #{tpu_custom_call.1} parent=1 // pred_fallthru
      _
    // Predicated region
    $region30: #{tpu_custom_call.1} parent=1 // pred_check
      _
    $region31: #{tpu_custom_call.1} parent=1 // pred_check_branch
      %1434 = sbr.rel (0) target = $region33
    $region32: #{tpu_custom_call.1} parent=1 // pred_region
      %1436 = dma.done [#allocation3], 256
    $region33: #{tpu_custom_call.1} parent=1 // pred_fallthru
      _
    %1437 = vsyncpa [#allocation3], 1

</llo_original>
